<compile_context>
chip_gen: v7x
topology: tpu7x:2x2x1
jax: 0.10.0
libtpu: 0.0.40
codegen_flags: <defaults>
</compile_context>

<pallas_src>
import functools

import jax
import jax.numpy as jnp
from jax import lax
from jax.experimental import pallas as pl
from jax.experimental.pallas import tpu as pltpu

BN_EPS = 1e-5
LANE = 128
MAX_TM = 512                      # rows per M tile
VMEM_LIMIT = 48 * 1024 * 1024     # > scoped defaults, < v7x physical 64 MiB


def _round_up(x, m):
    return (x + m - 1) // m * m


def _mosaic_params(grid_len):
    return pltpu.CompilerParams(
        dimension_semantics=("parallel",) * grid_len,
        vmem_limit_bytes=VMEM_LIMIT)


# --------------------------- Pallas kernels -------------------------------- #
def _conv_stats_kernel(p_ref, w_ref, y_ref, s_ref):
    # (TM, K) @ (K, Cp) on the MXU, f32 accumulation.
    y = jnp.dot(p_ref[...], w_ref[...], preferred_element_type=jnp.float32)
    y_ref[...] = y
    ssum = jnp.sum(y, axis=0, keepdims=True)                  # (1, Cp)
    ssq = jnp.sum(y * y, axis=0, keepdims=True)               # (1, Cp)
    fill = jnp.zeros((6, y.shape[1]), jnp.float32)
    s_ref[...] = jnp.concatenate([ssum, ssq, fill], axis=0)   # (8, Cp)


def conv_stats(patches, w, *, tm):
    m, k = patches.shape
    cp = w.shape[1]
    nt = m // tm
    cost = pl.CostEstimate(
        flops=2 * m * k * cp, transcendentals=0,
        bytes_accessed=patches.size * 2 + w.size * 2 + m * cp * 4 + nt * 8 * cp * 4)
    return pl.pallas_call(
        _conv_stats_kernel,
        out_shape=(jax.ShapeDtypeStruct((m, cp), jnp.float32),
                   jax.ShapeDtypeStruct((nt * 8, cp), jnp.float32)),
        grid_spec=pltpu.PrefetchScalarGridSpec(
            num_scalar_prefetch=0,
            grid=(nt,),
            in_specs=[pl.BlockSpec((tm, k), lambda i: (i, 0)),
                      pl.BlockSpec((k, cp), lambda i: (0, 0))],   # resident weight
            out_specs=[pl.BlockSpec((tm, cp), lambda i: (i, 0)),
                       pl.BlockSpec((8, cp), lambda i: (i, 0))]),
        compiler_params=_mosaic_params(1),
        cost_estimate=cost,
    )(patches, w)


def _bn_apply_kernel(y_ref, scale_ref, shift_ref, o_ref, *, relu):
    y = y_ref[...] * scale_ref[...] + shift_ref[...]
    if relu:
        y = jnp.maximum(y, 0.0)
    o_ref[...] = y


def _bn_apply_res_kernel(y_ref, scale_ref, shift_ref, res_ref, o_ref, *, relu):
    y = y_ref[...] * scale_ref[...] + shift_ref[...] + res_ref[...]
    if relu:
        y = jnp.maximum(y, 0.0)
    o_ref[...] = y


def bn_apply(y, scale, shift, res=None, *, relu, tm):
    m, cp = y.shape
    nt = m // tm
    tile_spec = pl.BlockSpec((tm, cp), lambda i: (i, 0))
    vec_spec = pl.BlockSpec((1, cp), lambda i: (0, 0))
    args = [y, scale, shift]
    in_specs = [tile_spec, vec_spec, vec_spec]
    if res is not None:
        args.append(res)
        in_specs.append(tile_spec)
        kernel = functools.partial(_bn_apply_res_kernel, relu=relu)
    else:
        kernel = functools.partial(_bn_apply_kernel, relu=relu)
    nbytes = sum(int(a.size) * a.dtype.itemsize for a in args) + m * cp * 4
    cost = pl.CostEstimate(flops=3 * m * cp, transcendentals=0,
                           bytes_accessed=nbytes)
    return pl.pallas_call(
        kernel,
        out_shape=jax.ShapeDtypeStruct((m, cp), jnp.float32),
        grid_spec=pltpu.PrefetchScalarGridSpec(
            num_scalar_prefetch=0, grid=(nt,),
            in_specs=in_specs,
            out_specs=tile_spec),
        compiler_params=_mosaic_params(1),
        cost_estimate=cost,
    )(*args)


def _conv_bias_kernel(p_ref, w_ref, b_ref, o_ref, *, relu):
    y = jnp.dot(p_ref[...], w_ref[...], preferred_element_type=jnp.float32)
    y = y + b_ref[...]
    if relu:
        y = jnp.maximum(y, 0.0)
    o_ref[...] = y


def conv_bias(patches, w, b, *, relu, tm):
    m, k = patches.shape
    cp = w.shape[1]
    nt = m // tm
    cost = pl.CostEstimate(
        flops=2 * m * k * cp, transcendentals=0,
        bytes_accessed=patches.size * 2 + w.size * 2 + b.size * 4 + m * cp * 4)
    return pl.pallas_call(
        functools.partial(_conv_bias_kernel, relu=relu),
        out_shape=jax.ShapeDtypeStruct((m, cp), jnp.float32),
        grid_spec=pltpu.PrefetchScalarGridSpec(
            num_scalar_prefetch=0, grid=(nt,),
            in_specs=[pl.BlockSpec((tm, k), lambda i: (i, 0)),
                      pl.BlockSpec((k, cp), lambda i: (0, 0)),
                      pl.BlockSpec((1, cp), lambda i: (0, 0))],
            out_specs=pl.BlockSpec((tm, cp), lambda i: (i, 0))),
        compiler_params=_mosaic_params(1),
        cost_estimate=cost,
    )(patches, w, b)


# ------------------------------- JAX glue ---------------------------------- #
def extract_patches(x_nhwc, k, stride, pad):
    """im2col for NHWC input -> (N*Ho*Wo, k*k*C)."""
    x = jnp.pad(x_nhwc, ((0, 0), (pad, pad), (pad, pad), (0, 0)))
    n, h, w, c = x.shape
    ho = (h - k) // stride + 1
    wo = (w - k) // stride + 1
    cols = []
    for i in range(k):
        for j in range(k):
            cols.append(x[:, i:i + stride * (ho - 1) + 1:stride,
                           j:j + stride * (wo - 1) + 1:stride, :])
    p = jnp.stack(cols, axis=3)                          # (N, Ho, Wo, k*k, C)
    return p.reshape(n * ho * wo, k * k * c), (n, ho, wo)


def apply_layer(x_nhwc, layer, res_nhwc=None):
    k, stride, pad = layer["k"], layer["stride"], layer["pad"]
    w = layer["w"]                                       # (k, k, cin, cout)
    cin, cout = w.shape[2], w.shape[3]
    cp = _round_up(cout, LANE)

    patches, (n, ho, wo) = extract_patches(x_nhwc, k, stride, pad)
    m = patches.shape[0]
    tm = MAX_TM if m >= MAX_TM else _round_up(m, 8)
    mp = _round_up(m, tm)
    if mp != m:
        patches = jnp.pad(patches, ((0, mp - m), (0, 0)))
    patches = patches.astype(jnp.bfloat16)               # halve DMA, bf16 MXU
    w2 = w.reshape(k * k * cin, cout)
    w2 = jnp.pad(w2, ((0, 0), (0, cp - cout))).astype(jnp.bfloat16)

    if layer["bn"]:
        # Conv bias is exactly cancelled by training-mode BatchNorm -> omitted.
        y, pstats = conv_stats(patches, w2, tm=tm)
        pstats = pstats.reshape(mp // tm, 8, cp)
        ssum = jnp.sum(pstats[:, 0, :], axis=0)
        ssq = jnp.sum(pstats[:, 1, :], axis=0)
        mean = ssum / m                                  # biased stats over N*H*W
        var = jnp.maximum(ssq / m - mean * mean, 0.0)
        inv = lax.rsqrt(var + BN_EPS)
        gamma = jnp.pad(layer["gamma"], (0, cp - cout))
        beta = jnp.pad(layer["beta"], (0, cp - cout))
        scale = (gamma * inv).reshape(1, cp)
        shift = (beta - mean * gamma * inv).reshape(1, cp)
        if res_nhwc is not None:
            res = res_nhwc.reshape(m, cout)
            res = jnp.pad(res, ((0, mp - m), (0, cp - cout)))
        else:
            res = None
        out = bn_apply(y, scale, shift, res, relu=layer["relu"], tm=tm)
    else:
        b = jnp.pad(layer["b"], (0, cp - cout)).reshape(1, cp)
        out = conv_bias(patches, w2, b, relu=layer["relu"], tm=tm)

    return out[:m, :cout].reshape(n, ho, wo, cout)


def encoder_forward(params, x_nchw):
    x = jnp.transpose(x_nchw, (0, 2, 3, 1))              # NCHW -> NHWC
    for kind, p in params:
        if kind == "conv":
            x = apply_layer(x, p)
        else:                                            # ResBlock
            l1, l2 = p
            h = apply_layer(x, l1)                       # conv + BN + ReLU
            x = apply_layer(h, l2, res_nhwc=x)           # conv + BN, +input, ReLU
    return jnp.transpose(x, (0, 3, 1, 2))                # NHWC -> NCHW


# --------------------------- parameter building ---------------------------- #
def init_conv(key, cin, cout, k, stride, pad, bn, relu):
    kw, kb = jax.random.split(key)
    fan_in = cin * k * k
    bound = 1.0 / (fan_in ** 0.5)
    w = jax.random.uniform(kw, (k, k, cin, cout), jnp.float32, -bound, bound)
    b = jax.random.uniform(kb, (cout,), jnp.float32, -bound, bound)
    d = dict(w=w, b=b, k=k, stride=stride, pad=pad, bn=bn, relu=relu)
    if bn:
        d["gamma"] = jnp.ones((cout,), jnp.float32)      # PyTorch BN default
        d["beta"] = jnp.zeros((cout,), jnp.float32)
    return d


def init_encoder_params(key, data_shape, hidden_size, num_res_block,
                        embedding_size):
    keys = iter(jax.random.split(key, 4 + len(hidden_size) + 2 * num_res_block))
    params = []
    # Conv(data_c -> hidden[0], 4, 2, 1) + BN + ReLU
    params.append(("conv", init_conv(next(keys), data_shape[0], hidden_size[0],
                                     4, 2, 1, True, True)))
    # Downsampling stack
    for i in range(len(hidden_size) - 1):
        params.append(("conv", init_conv(next(keys), hidden_size[i],
                                         hidden_size[i + 1], 4, 2, 1,
                                         True, True)))
    # ResBlocks on hidden_size[-1]
    for _ in range(num_res_block):
        l1 = init_conv(next(keys), hidden_size[-1], hidden_size[-1],
                       3, 1, 1, True, True)
        # second conv: BN, then + input, then ReLU (kernel applies in that order)
        l2 = init_conv(next(keys), hidden_size[-1], hidden_size[-1],
                       3, 1, 1, True, True)
        params.append(("res", (l1, l2)))
    # Final Conv(hidden[-1] -> embedding_size, 3, 1, 1), no BN / ReLU
    params.append(("conv", init_conv(next(keys), hidden_size[-1],
                                     embedding_size, 3, 1, 1, False, False)))
    return params


# --------------------------------- main ------------------------------------ #
if __name__ == "__main__":
    key = jax.random.PRNGKey(0)
    k_params, k_input = jax.random.split(key)

    # Small, module-consistent config.
    data_shape = (4, 16, 16)      # (C, H, W)
    hidden_size = [8, 16]
    num_res_block = 1
    embedding_size = 8
    batch = 2

    params = init_encoder_params(k_params, data_shape, hidden_size,
                                 num_res_block, embedding_size)
    x = jax.random.normal(k_input, (batch,) + data_shape, jnp.float32)

    out = jax.jit(lambda a: encoder_forward(params, a))(x)
    jax.block_until_ready(out)

    # Two stride-2 convs: 16 -> 8 -> 4 spatial; channels -> embedding_size.
    assert out.shape == (batch, embedding_size, 4, 4), out.shape
    assert out.dtype == jnp.float32
    print("KERNEL_OK")
</pallas_src>

<mosaic_0001>
module attributes {stable_mosaic.version = 11 : i64} {
  func.func @_conv_stats_kernel(%arg0: i32, %arg1: memref<128x64xbf16, #tpu.memory_space<vmem>>, %arg2: memref<64x128xbf16, #tpu.memory_space<vmem>>, %arg3: memref<128x128xf32, #tpu.memory_space<vmem>>, %arg4: memref<8x128xf32, #tpu.memory_space<vmem>>) attributes {dimension_semantics = [#tpu.dimension_semantics<parallel>], iteration_bounds = array<i64: 1>, scalar_prefetch = 0 : i64, scratch_operands = 0 : i64, tpu.core_type = #tpu.core_type<tc>, window_params = [{transform_indices = @transform_0, window_bounds = array<i64: 128, 64>}, {pipeline_mode = #tpu.pipeline_mode<synchronous>, transform_indices = @transform_1, window_bounds = array<i64: 64, 128>}, {transform_indices = @transform_2, window_bounds = array<i64: 128, 128>}, {transform_indices = @transform_3, window_bounds = array<i64: 8, 128>}]} {
    %c0 = arith.constant 0 : index
    %c0_0 = arith.constant 0 : index
    %0 = vector.load %arg1[%c0, %c0_0] : memref<128x64xbf16, #tpu.memory_space<vmem>>, vector<128x64xbf16>
    %c0_1 = arith.constant 0 : index
    %c0_2 = arith.constant 0 : index
    %1 = vector.load %arg2[%c0_1, %c0_2] : memref<64x128xbf16, #tpu.memory_space<vmem>>, vector<64x128xbf16>
    %cst = arith.constant dense<0.000000e+00> : vector<128x128xf32>
    %2 = tpu.matmul %0, %1, %cst {dimension_numbers = #tpu.dot_dimension_numbers<[1], [0], [0], [1], [0, 0, 1, 1], [], []>} : vector<128x64xbf16>, vector<64x128xbf16>, vector<128x128xf32> -> vector<128x128xf32>
    %c0_3 = arith.constant 0 : index
    %c0_4 = arith.constant 0 : index
    %3 = vector.load %arg3[%c0_3, %c0_4] : memref<128x128xf32, #tpu.memory_space<vmem>>, vector<128x128xf32>
    tpu.vector_store %arg3[%c0_3, %c0_4], %2 {strides = array<i32>} : memref<128x128xf32, #tpu.memory_space<vmem>>, vector<128x128xf32>,
    %cst_5 = arith.constant dense<0.000000e+00> : vector<128xf32>
    %4 = vector.multi_reduction <add>, %2, %cst_5 [0] : vector<128x128xf32> to vector<128xf32>
    %5 = vector.shape_cast %4 : vector<128xf32> to vector<1x128xf32>
    %6 = arith.mulf %2, %2 : vector<128x128xf32>
    %cst_6 = arith.constant dense<0.000000e+00> : vector<128xf32>
    %7 = vector.multi_reduction <add>, %6, %cst_6 [0] : vector<128x128xf32> to vector<128xf32>
    %8 = vector.shape_cast %7 : vector<128xf32> to vector<1x128xf32>
    %cst_7 = arith.constant 0.000000e+00 : f32
    %9 = vector.broadcast %cst_7 : f32 to vector<6x128xf32>
    %10 = tpu.concatenate %5, %8, %9 in 0 : vector<1x128xf32>, vector<1x128xf32>, vector<6x128xf32> -> vector<8x128xf32>
    %c0_8 = arith.constant 0 : index
    %c0_9 = arith.constant 0 : index
    %11 = vector.load %arg4[%c0_8, %c0_9] : memref<8x128xf32, #tpu.memory_space<vmem>>, vector<8x128xf32>
    tpu.vector_store %arg4[%c0_8, %c0_9], %10 {strides = array<i32>} : memref<8x128xf32, #tpu.memory_space<vmem>>, vector<8x128xf32>,
    return
  }
  func.func @transform_0(%arg0: i32) -> (i32, i32) {
    %c0_i32 = arith.constant 0 : i32
    %c0_i32_0 = arith.constant 0 : i32
    return %arg0, %c0_i32 : i32, i32
  }
  func.func @transform_1(%arg0: i32) -> (i32, i32) {
    %c0_i32 = arith.constant 0 : i32
    %c0_i32_0 = arith.constant 0 : i32
    %c0_i32_1 = arith.constant 0 : i32
    return %c0_i32, %c0_i32_0 : i32, i32
  }
  func.func @transform_2(%arg0: i32) -> (i32, i32) {
    %c0_i32 = arith.constant 0 : i32
    %c0_i32_0 = arith.constant 0 : i32
    return %arg0, %c0_i32 : i32, i32
  }
  func.func @transform_3(%arg0: i32) -> (i32, i32) {
    %c0_i32 = arith.constant 0 : i32
    %c0_i32_0 = arith.constant 0 : i32
    return %arg0, %c0_i32 : i32, i32
  }
}

module attributes {stable_mosaic.version = 11 : i64} {
  func.func @_bn_apply_kernel(%arg0: i32, %arg1: memref<128x128xf32, #tpu.memory_space<vmem>>, %arg2: memref<1x128xf32, #tpu.memory_space<vmem>>, %arg3: memref<1x128xf32, #tpu.memory_space<vmem>>, %arg4: memref<128x128xf32, #tpu.memory_space<vmem>>) attributes {dimension_semantics = [#tpu.dimension_semantics<parallel>], iteration_bounds = array<i64: 1>, scalar_prefetch = 0 : i64, scratch_operands = 0 : i64, tpu.core_type = #tpu.core_type<tc>, window_params = [{transform_indices = @transform_0, window_bounds = array<i64: 128, 128>}, {pipeline_mode = #tpu.pipeline_mode<synchronous>, transform_indices = @transform_1, window_bounds = array<i64: 1, 128>}, {pipeline_mode = #tpu.pipeline_mode<synchronous>, transform_indices = @transform_2, window_bounds = array<i64: 1, 128>}, {transform_indices = @transform_3, window_bounds = array<i64: 128, 128>}]} {
    %c0 = arith.constant 0 : index
    %c0_0 = arith.constant 0 : index
    %0 = vector.load %arg1[%c0, %c0_0] : memref<128x128xf32, #tpu.memory_space<vmem>>, vector<128x128xf32>
    %c0_1 = arith.constant 0 : index
    %c0_2 = arith.constant 0 : index
    %1 = vector.load %arg2[%c0_1, %c0_2] : memref<1x128xf32, #tpu.memory_space<vmem>>, vector<1x128xf32>
    %2 = vector.broadcast %1 : vector<1x128xf32> to vector<128x128xf32>
    %3 = arith.mulf %0, %2 : vector<128x128xf32>
    %c0_3 = arith.constant 0 : index
    %c0_4 = arith.constant 0 : index
    %4 = vector.load %arg3[%c0_3, %c0_4] : memref<1x128xf32, #tpu.memory_space<vmem>>, vector<1x128xf32>
    %5 = vector.broadcast %4 : vector<1x128xf32> to vector<128x128xf32>
    %6 = arith.addf %3, %5 : vector<128x128xf32>
    %cst = arith.constant 0.000000e+00 : f32
    %7 = vector.broadcast %cst : f32 to vector<128x128xf32>
    %8 = arith.maximumf %6, %7 : vector<128x128xf32>
    %c0_5 = arith.constant 0 : index
    %c0_6 = arith.constant 0 : index
    %9 = vector.load %arg4[%c0_5, %c0_6] : memref<128x128xf32, #tpu.memory_space<vmem>>, vector<128x128xf32>
    tpu.vector_store %arg4[%c0_5, %c0_6], %8 {strides = array<i32>} : memref<128x128xf32, #tpu.memory_space<vmem>>, vector<128x128xf32>,
    return
  }
  func.func @transform_0(%arg0: i32) -> (i32, i32) {
    %c0_i32 = arith.constant 0 : i32
    %c0_i32_0 = arith.constant 0 : i32
    return %arg0, %c0_i32 : i32, i32
  }
  func.func @transform_1(%arg0: i32) -> (i32, i32) {
    %c0_i32 = arith.constant 0 : i32
    %c0_i32_0 = arith.constant 0 : i32
    %c0_i32_1 = arith.constant 0 : i32
    return %c0_i32, %c0_i32_0 : i32, i32
  }
  func.func @transform_2(%arg0: i32) -> (i32, i32) {
    %c0_i32 = arith.constant 0 : i32
    %c0_i32_0 = arith.constant 0 : i32
    %c0_i32_1 = arith.constant 0 : i32
    return %c0_i32, %c0_i32_0 : i32, i32
  }
  func.func @transform_3(%arg0: i32) -> (i32, i32) {
    %c0_i32 = arith.constant 0 : i32
    %c0_i32_0 = arith.constant 0 : i32
    return %arg0, %c0_i32 : i32, i32
  }
}

module attributes {stable_mosaic.version = 11 : i64} {
  func.func @_bn_apply_kernel(%arg0: i32, %arg1: memref<32x128xf32, #tpu.memory_space<vmem>>, %arg2: memref<1x128xf32, #tpu.memory_space<vmem>>, %arg3: memref<1x128xf32, #tpu.memory_space<vmem>>, %arg4: memref<32x128xf32, #tpu.memory_space<vmem>>) attributes {dimension_semantics = [#tpu.dimension_semantics<parallel>], iteration_bounds = array<i64: 1>, scalar_prefetch = 0 : i64, scratch_operands = 0 : i64, tpu.core_type = #tpu.core_type<tc>, window_params = [{transform_indices = @transform_0, window_bounds = array<i64: 32, 128>}, {pipeline_mode = #tpu.pipeline_mode<synchronous>, transform_indices = @transform_1, window_bounds = array<i64: 1, 128>}, {pipeline_mode = #tpu.pipeline_mode<synchronous>, transform_indices = @transform_2, window_bounds = array<i64: 1, 128>}, {transform_indices = @transform_3, window_bounds = array<i64: 32, 128>}]} {
    %c0 = arith.constant 0 : index
    %c0_0 = arith.constant 0 : index
    %0 = vector.load %arg1[%c0, %c0_0] : memref<32x128xf32, #tpu.memory_space<vmem>>, vector<32x128xf32>
    %c0_1 = arith.constant 0 : index
    %c0_2 = arith.constant 0 : index
    %1 = vector.load %arg2[%c0_1, %c0_2] : memref<1x128xf32, #tpu.memory_space<vmem>>, vector<1x128xf32>
    %2 = vector.broadcast %1 : vector<1x128xf32> to vector<32x128xf32>
    %3 = arith.mulf %0, %2 : vector<32x128xf32>
    %c0_3 = arith.constant 0 : index
    %c0_4 = arith.constant 0 : index
    %4 = vector.load %arg3[%c0_3, %c0_4] : memref<1x128xf32, #tpu.memory_space<vmem>>, vector<1x128xf32>
    %5 = vector.broadcast %4 : vector<1x128xf32> to vector<32x128xf32>
    %6 = arith.addf %3, %5 : vector<32x128xf32>
    %cst = arith.constant 0.000000e+00 : f32
    %7 = vector.broadcast %cst : f32 to vector<32x128xf32>
    %8 = arith.maximumf %6, %7 : vector<32x128xf32>
    %c0_5 = arith.constant 0 : index
    %c0_6 = arith.constant 0 : index
    %9 = vector.load %arg4[%c0_5, %c0_6] : memref<32x128xf32, #tpu.memory_space<vmem>>, vector<32x128xf32>
    tpu.vector_store %arg4[%c0_5, %c0_6], %8 {strides = array<i32>} : memref<32x128xf32, #tpu.memory_space<vmem>>, vector<32x128xf32>,
    return
  }
  func.func @transform_0(%arg0: i32) -> (i32, i32) {
    %c0_i32 = arith.constant 0 : i32
    %c0_i32_0 = arith.constant 0 : i32
    return %arg0, %c0_i32 : i32, i32
  }
  func.func @transform_1(%arg0: i32) -> (i32, i32) {
    %c0_i32 = arith.constant 0 : i32
    %c0_i32_0 = arith.constant 0 : i32
    %c0_i32_1 = arith.constant 0 : i32
    return %c0_i32, %c0_i32_0 : i32, i32
  }
  func.func @transform_2(%arg0: i32) -> (i32, i32) {
    %c0_i32 = arith.constant 0 : i32
    %c0_i32_0 = arith.constant 0 : i32
    %c0_i32_1 = arith.constant 0 : i32
    return %c0_i32, %c0_i32_0 : i32, i32
  }
  func.func @transform_3(%arg0: i32) -> (i32, i32) {
    %c0_i32 = arith.constant 0 : i32
    %c0_i32_0 = arith.constant 0 : i32
    return %arg0, %c0_i32 : i32, i32
  }
}

module attributes {stable_mosaic.version = 11 : i64} {
  func.func @_conv_stats_kernel(%arg0: i32, %arg1: memref<32x128xbf16, #tpu.memory_space<vmem>>, %arg2: memref<128x128xbf16, #tpu.memory_space<vmem>>, %arg3: memref<32x128xf32, #tpu.memory_space<vmem>>, %arg4: memref<8x128xf32, #tpu.memory_space<vmem>>) attributes {dimension_semantics = [#tpu.dimension_semantics<parallel>], iteration_bounds = array<i64: 1>, scalar_prefetch = 0 : i64, scratch_operands = 0 : i64, tpu.core_type = #tpu.core_type<tc>, window_params = [{transform_indices = @transform_0, window_bounds = array<i64: 32, 128>}, {pipeline_mode = #tpu.pipeline_mode<synchronous>, transform_indices = @transform_1, window_bounds = array<i64: 128, 128>}, {transform_indices = @transform_2, window_bounds = array<i64: 32, 128>}, {transform_indices = @transform_3, window_bounds = array<i64: 8, 128>}]} {
    %c0 = arith.constant 0 : index
    %c0_0 = arith.constant 0 : index
    %0 = vector.load %arg1[%c0, %c0_0] : memref<32x128xbf16, #tpu.memory_space<vmem>>, vector<32x128xbf16>
    %c0_1 = arith.constant 0 : index
    %c0_2 = arith.constant 0 : index
    %1 = vector.load %arg2[%c0_1, %c0_2] : memref<128x128xbf16, #tpu.memory_space<vmem>>, vector<128x128xbf16>
    %cst = arith.constant dense<0.000000e+00> : vector<32x128xf32>
    %2 = tpu.matmul %0, %1, %cst {dimension_numbers = #tpu.dot_dimension_numbers<[1], [0], [0], [1], [0, 0, 1, 1], [], []>} : vector<32x128xbf16>, vector<128x128xbf16>, vector<32x128xf32> -> vector<32x128xf32>
    %c0_3 = arith.constant 0 : index
    %c0_4 = arith.constant 0 : index
    %3 = vector.load %arg3[%c0_3, %c0_4] : memref<32x128xf32, #tpu.memory_space<vmem>>, vector<32x128xf32>
    tpu.vector_store %arg3[%c0_3, %c0_4], %2 {strides = array<i32>} : memref<32x128xf32, #tpu.memory_space<vmem>>, vector<32x128xf32>,
    %cst_5 = arith.constant dense<0.000000e+00> : vector<128xf32>
    %4 = vector.multi_reduction <add>, %2, %cst_5 [0] : vector<32x128xf32> to vector<128xf32>
    %5 = vector.shape_cast %4 : vector<128xf32> to vector<1x128xf32>
    %6 = arith.mulf %2, %2 : vector<32x128xf32>
    %cst_6 = arith.constant dense<0.000000e+00> : vector<128xf32>
    %7 = vector.multi_reduction <add>, %6, %cst_6 [0] : vector<32x128xf32> to vector<128xf32>
    %8 = vector.shape_cast %7 : vector<128xf32> to vector<1x128xf32>
    %cst_7 = arith.constant 0.000000e+00 : f32
    %9 = vector.broadcast %cst_7 : f32 to vector<6x128xf32>
    %10 = tpu.concatenate %5, %8, %9 in 0 : vector<1x128xf32>, vector<1x128xf32>, vector<6x128xf32> -> vector<8x128xf32>
    %c0_8 = arith.constant 0 : index
    %c0_9 = arith.constant 0 : index
    %11 = vector.load %arg4[%c0_8, %c0_9] : memref<8x128xf32, #tpu.memory_space<vmem>>, vector<8x128xf32>
    tpu.vector_store %arg4[%c0_8, %c0_9], %10 {strides = array<i32>} : memref<8x128xf32, #tpu.memory_space<vmem>>, vector<8x128xf32>,
    return
  }
  func.func @transform_0(%arg0: i32) -> (i32, i32) {
    %c0_i32 = arith.constant 0 : i32
    %c0_i32_0 = arith.constant 0 : i32
    return %arg0, %c0_i32 : i32, i32
  }
  func.func @transform_1(%arg0: i32) -> (i32, i32) {
    %c0_i32 = arith.constant 0 : i32
    %c0_i32_0 = arith.constant 0 : i32
    %c0_i32_1 = arith.constant 0 : i32
    return %c0_i32, %c0_i32_0 : i32, i32
  }
  func.func @transform_2(%arg0: i32) -> (i32, i32) {
    %c0_i32 = arith.constant 0 : i32
    %c0_i32_0 = arith.constant 0 : i32
    return %arg0, %c0_i32 : i32, i32
  }
  func.func @transform_3(%arg0: i32) -> (i32, i32) {
    %c0_i32 = arith.constant 0 : i32
    %c0_i32_0 = arith.constant 0 : i32
    return %arg0, %c0_i32 : i32, i32
  }
}

module attributes {stable_mosaic.version = 11 : i64} {
  func.func @_conv_stats_kernel(%arg0: i32, %arg1: memref<32x144xbf16, #tpu.memory_space<vmem>>, %arg2: memref<144x128xbf16, #tpu.memory_space<vmem>>, %arg3: memref<32x128xf32, #tpu.memory_space<vmem>>, %arg4: memref<8x128xf32, #tpu.memory_space<vmem>>) attributes {dimension_semantics = [#tpu.dimension_semantics<parallel>], iteration_bounds = array<i64: 1>, scalar_prefetch = 0 : i64, scratch_operands = 0 : i64, tpu.core_type = #tpu.core_type<tc>, window_params = [{transform_indices = @transform_0, window_bounds = array<i64: 32, 144>}, {pipeline_mode = #tpu.pipeline_mode<synchronous>, transform_indices = @transform_1, window_bounds = array<i64: 144, 128>}, {transform_indices = @transform_2, window_bounds = array<i64: 32, 128>}, {transform_indices = @transform_3, window_bounds = array<i64: 8, 128>}]} {
    %c0 = arith.constant 0 : index
    %c0_0 = arith.constant 0 : index
    %0 = vector.load %arg1[%c0, %c0_0] : memref<32x144xbf16, #tpu.memory_space<vmem>>, vector<32x144xbf16>
    %c0_1 = arith.constant 0 : index
    %c0_2 = arith.constant 0 : index
    %1 = vector.load %arg2[%c0_1, %c0_2] : memref<144x128xbf16, #tpu.memory_space<vmem>>, vector<144x128xbf16>
    %cst = arith.constant dense<0.000000e+00> : vector<32x128xf32>
    %2 = tpu.matmul %0, %1, %cst {dimension_numbers = #tpu.dot_dimension_numbers<[1], [0], [0], [1], [0, 0, 1, 1], [], []>} : vector<32x144xbf16>, vector<144x128xbf16>, vector<32x128xf32> -> vector<32x128xf32>
    %c0_3 = arith.constant 0 : index
    %c0_4 = arith.constant 0 : index
    %3 = vector.load %arg3[%c0_3, %c0_4] : memref<32x128xf32, #tpu.memory_space<vmem>>, vector<32x128xf32>
    tpu.vector_store %arg3[%c0_3, %c0_4], %2 {strides = array<i32>} : memref<32x128xf32, #tpu.memory_space<vmem>>, vector<32x128xf32>,
    %cst_5 = arith.constant dense<0.000000e+00> : vector<128xf32>
    %4 = vector.multi_reduction <add>, %2, %cst_5 [0] : vector<32x128xf32> to vector<128xf32>
    %5 = vector.shape_cast %4 : vector<128xf32> to vector<1x128xf32>
    %6 = arith.mulf %2, %2 : vector<32x128xf32>
    %cst_6 = arith.constant dense<0.000000e+00> : vector<128xf32>
    %7 = vector.multi_reduction <add>, %6, %cst_6 [0] : vector<32x128xf32> to vector<128xf32>
    %8 = vector.shape_cast %7 : vector<128xf32> to vector<1x128xf32>
    %cst_7 = arith.constant 0.000000e+00 : f32
    %9 = vector.broadcast %cst_7 : f32 to vector<6x128xf32>
    %10 = tpu.concatenate %5, %8, %9 in 0 : vector<1x128xf32>, vector<1x128xf32>, vector<6x128xf32> -> vector<8x128xf32>
    %c0_8 = arith.constant 0 : index
    %c0_9 = arith.constant 0 : index
    %11 = vector.load %arg4[%c0_8, %c0_9] : memref<8x128xf32, #tpu.memory_space<vmem>>, vector<8x128xf32>
    tpu.vector_store %arg4[%c0_8, %c0_9], %10 {strides = array<i32>} : memref<8x128xf32, #tpu.memory_space<vmem>>, vector<8x128xf32>,
    return
  }
  func.func @transform_0(%arg0: i32) -> (i32, i32) {
    %c0_i32 = arith.constant 0 : i32
    %c0_i32_0 = arith.constant 0 : i32
    return %arg0, %c0_i32 : i32, i32
  }
  func.func @transform_1(%arg0: i32) -> (i32, i32) {
    %c0_i32 = arith.constant 0 : i32
    %c0_i32_0 = arith.constant 0 : i32
    %c0_i32_1 = arith.constant 0 : i32
    return %c0_i32, %c0_i32_0 : i32, i32
  }
  func.func @transform_2(%arg0: i32) -> (i32, i32) {
    %c0_i32 = arith.constant 0 : i32
    %c0_i32_0 = arith.constant 0 : i32
    return %arg0, %c0_i32 : i32, i32
  }
  func.func @transform_3(%arg0: i32) -> (i32, i32) {
    %c0_i32 = arith.constant 0 : i32
    %c0_i32_0 = arith.constant 0 : i32
    return %arg0, %c0_i32 : i32, i32
  }
}

module attributes {stable_mosaic.version = 11 : i64} {
  func.func @_bn_apply_res_kernel(%arg0: i32, %arg1: memref<32x128xf32, #tpu.memory_space<vmem>>, %arg2: memref<1x128xf32, #tpu.memory_space<vmem>>, %arg3: memref<1x128xf32, #tpu.memory_space<vmem>>, %arg4: memref<32x128xf32, #tpu.memory_space<vmem>>, %arg5: memref<32x128xf32, #tpu.memory_space<vmem>>) attributes {dimension_semantics = [#tpu.dimension_semantics<parallel>], iteration_bounds = array<i64: 1>, scalar_prefetch = 0 : i64, scratch_operands = 0 : i64, tpu.core_type = #tpu.core_type<tc>, window_params = [{transform_indices = @transform_0, window_bounds = array<i64: 32, 128>}, {pipeline_mode = #tpu.pipeline_mode<synchronous>, transform_indices = @transform_1, window_bounds = array<i64: 1, 128>}, {pipeline_mode = #tpu.pipeline_mode<synchronous>, transform_indices = @transform_2, window_bounds = array<i64: 1, 128>}, {transform_indices = @transform_3, window_bounds = array<i64: 32, 128>}, {transform_indices = @transform_4, window_bounds = array<i64: 32, 128>}]} {
    %c0 = arith.constant 0 : index
    %c0_0 = arith.constant 0 : index
    %0 = vector.load %arg1[%c0, %c0_0] : memref<32x128xf32, #tpu.memory_space<vmem>>, vector<32x128xf32>
    %c0_1 = arith.constant 0 : index
    %c0_2 = arith.constant 0 : index
    %1 = vector.load %arg2[%c0_1, %c0_2] : memref<1x128xf32, #tpu.memory_space<vmem>>, vector<1x128xf32>
    %2 = vector.broadcast %1 : vector<1x128xf32> to vector<32x128xf32>
    %3 = arith.mulf %0, %2 : vector<32x128xf32>
    %c0_3 = arith.constant 0 : index
    %c0_4 = arith.constant 0 : index
    %4 = vector.load %arg3[%c0_3, %c0_4] : memref<1x128xf32, #tpu.memory_space<vmem>>, vector<1x128xf32>
    %5 = vector.broadcast %4 : vector<1x128xf32> to vector<32x128xf32>
    %6 = arith.addf %3, %5 : vector<32x128xf32>
    %c0_5 = arith.constant 0 : index
    %c0_6 = arith.constant 0 : index
    %7 = vector.load %arg4[%c0_5, %c0_6] : memref<32x128xf32, #tpu.memory_space<vmem>>, vector<32x128xf32>
    %8 = arith.addf %6, %7 : vector<32x128xf32>
    %cst = arith.constant 0.000000e+00 : f32
    %9 = vector.broadcast %cst : f32 to vector<32x128xf32>
    %10 = arith.maximumf %8, %9 : vector<32x128xf32>
    %c0_7 = arith.constant 0 : index
    %c0_8 = arith.constant 0 : index
    %11 = vector.load %arg5[%c0_7, %c0_8] : memref<32x128xf32, #tpu.memory_space<vmem>>, vector<32x128xf32>
    tpu.vector_store %arg5[%c0_7, %c0_8], %10 {strides = array<i32>} : memref<32x128xf32, #tpu.memory_space<vmem>>, vector<32x128xf32>,
    return
  }
  func.func @transform_0(%arg0: i32) -> (i32, i32) {
    %c0_i32 = arith.constant 0 : i32
    %c0_i32_0 = arith.constant 0 : i32
    return %arg0, %c0_i32 : i32, i32
  }
  func.func @transform_1(%arg0: i32) -> (i32, i32) {
    %c0_i32 = arith.constant 0 : i32
    %c0_i32_0 = arith.constant 0 : i32
    %c0_i32_1 = arith.constant 0 : i32
    return %c0_i32, %c0_i32_0 : i32, i32
  }
  func.func @transform_2(%arg0: i32) -> (i32, i32) {
    %c0_i32 = arith.constant 0 : i32
    %c0_i32_0 = arith.constant 0 : i32
    %c0_i32_1 = arith.constant 0 : i32
    return %c0_i32, %c0_i32_0 : i32, i32
  }
  func.func @transform_3(%arg0: i32) -> (i32, i32) {
    %c0_i32 = arith.constant 0 : i32
    %c0_i32_0 = arith.constant 0 : i32
    return %arg0, %c0_i32 : i32, i32
  }
  func.func @transform_4(%arg0: i32) -> (i32, i32) {
    %c0_i32 = arith.constant 0 : i32
    %c0_i32_0 = arith.constant 0 : i32
    return %arg0, %c0_i32 : i32, i32
  }
}

module attributes {stable_mosaic.version = 11 : i64} {
  func.func @_conv_bias_kernel(%arg0: i32, %arg1: memref<32x144xbf16, #tpu.memory_space<vmem>>, %arg2: memref<144x128xbf16, #tpu.memory_space<vmem>>, %arg3: memref<1x128xf32, #tpu.memory_space<vmem>>, %arg4: memref<32x128xf32, #tpu.memory_space<vmem>>) attributes {dimension_semantics = [#tpu.dimension_semantics<parallel>], iteration_bounds = array<i64: 1>, scalar_prefetch = 0 : i64, scratch_operands = 0 : i64, tpu.core_type = #tpu.core_type<tc>, window_params = [{transform_indices = @transform_0, window_bounds = array<i64: 32, 144>}, {pipeline_mode = #tpu.pipeline_mode<synchronous>, transform_indices = @transform_1, window_bounds = array<i64: 144, 128>}, {pipeline_mode = #tpu.pipeline_mode<synchronous>, transform_indices = @transform_2, window_bounds = array<i64: 1, 128>}, {transform_indices = @transform_3, window_bounds = array<i64: 32, 128>}]} {
    %c0 = arith.constant 0 : index
    %c0_0 = arith.constant 0 : index
    %0 = vector.load %arg1[%c0, %c0_0] : memref<32x144xbf16, #tpu.memory_space<vmem>>, vector<32x144xbf16>
    %c0_1 = arith.constant 0 : index
    %c0_2 = arith.constant 0 : index
    %1 = vector.load %arg2[%c0_1, %c0_2] : memref<144x128xbf16, #tpu.memory_space<vmem>>, vector<144x128xbf16>
    %cst = arith.constant dense<0.000000e+00> : vector<32x128xf32>
    %2 = tpu.matmul %0, %1, %cst {dimension_numbers = #tpu.dot_dimension_numbers<[1], [0], [0], [1], [0, 0, 1, 1], [], []>} : vector<32x144xbf16>, vector<144x128xbf16>, vector<32x128xf32> -> vector<32x128xf32>
    %c0_3 = arith.constant 0 : index
    %c0_4 = arith.constant 0 : index
    %3 = vector.load %arg3[%c0_3, %c0_4] : memref<1x128xf32, #tpu.memory_space<vmem>>, vector<1x128xf32>
    %4 = vector.broadcast %3 : vector<1x128xf32> to vector<32x128xf32>
    %5 = arith.addf %2, %4 : vector<32x128xf32>
    %c0_5 = arith.constant 0 : index
    %c0_6 = arith.constant 0 : index
    %6 = vector.load %arg4[%c0_5, %c0_6] : memref<32x128xf32, #tpu.memory_space<vmem>>, vector<32x128xf32>
    tpu.vector_store %arg4[%c0_5, %c0_6], %5 {strides = array<i32>} : memref<32x128xf32, #tpu.memory_space<vmem>>, vector<32x128xf32>,
    return
  }
  func.func @transform_0(%arg0: i32) -> (i32, i32) {
    %c0_i32 = arith.constant 0 : i32
    %c0_i32_0 = arith.constant 0 : i32
    return %arg0, %c0_i32 : i32, i32
  }
  func.func @transform_1(%arg0: i32) -> (i32, i32) {
    %c0_i32 = arith.constant 0 : i32
    %c0_i32_0 = arith.constant 0 : i32
    %c0_i32_1 = arith.constant 0 : i32
    return %c0_i32, %c0_i32_0 : i32, i32
  }
  func.func @transform_2(%arg0: i32) -> (i32, i32) {
    %c0_i32 = arith.constant 0 : i32
    %c0_i32_0 = arith.constant 0 : i32
    %c0_i32_1 = arith.constant 0 : i32
    return %c0_i32, %c0_i32_0 : i32, i32
  }
  func.func @transform_3(%arg0: i32) -> (i32, i32) {
    %c0_i32 = arith.constant 0 : i32
    %c0_i32_0 = arith.constant 0 : i32
    return %arg0, %c0_i32 : i32, i32
  }
}

</mosaic_0001>

<llo_original>
// kernel: _lambda_.10
$region0: #{_lambda_.10}
  #allocation0 [shape = 'u32[]', space=smem, size = 0x4, offset = 0x4, fixed_abs, tag = 'smem constant byte address 0x4 - core index']
  #allocation1 [shape = 'u32[144,128]{1,0:T(1,128)}', space=vmem, size = 0x12000, scoped, tag = 'internal scratch']
  %s0 = inlined_call_operand.vmem [shape: f32[128,128], index: 0, kind: input, shape index: {}]
  %s1 = inlined_call_operand.vmem [shape: f32[1,128], index: 1, kind: input, shape index: {}]
  %s2 = inlined_call_operand.vmem [shape: f32[1,128], index: 2, kind: input, shape index: {}]
  %s3 = inlined_call_operand.vmem [shape: f32[128,128], index: 3, kind: output, shape index: {}]
  %s4 = sld [smem:[#allocation0]]
  $region22: #{_lambda_.10} parent=0
    _
  %s6 = ssub.s32 1, %s4
  %s7 = scalar_select 0, %s6, %s4
  // Predicated region
  $region2: #{_lambda_.10} parent=0 // pred_check
    _
  $region3: #{_lambda_.10} parent=0 // pred_check_branch
    %9 = sbr.rel (0) target = $region5
  $region4: #{_lambda_.10} parent=0 // pred_region
    _
  $region5: #{_lambda_.10} parent=0 // pred_fallthru
    _
  // Predicated region
  $region6: #{_lambda_.10} parent=0 // pred_check
    _
  $region7: #{_lambda_.10} parent=0 // pred_check_branch
    %11 = sbr.rel (0) target = $region9
  $region8: #{_lambda_.10} parent=0 // pred_region
    _
  $region9: #{_lambda_.10} parent=0 // pred_fallthru
    _
  // Predicated region
  $region10: #{_lambda_.10} parent=0 // pred_check
    _
  $region11: #{_lambda_.10} parent=0 // pred_check_branch
    %13 = sbr.rel (0) target = $region13
  $region12: #{_lambda_.10} parent=0 // pred_region
    _
  $region13: #{_lambda_.10} parent=0 // pred_fallthru
    _
  %v14 = vld [vmem:[%s0] sm:$0xff]
  %v15 = vld [vmem:[%s0 + $0x8] sm:$0xff]
  %v16 = vld [vmem:[%s0 + $0x10] sm:$0xff]
  %v17 = vld [vmem:[%s0 + $0x18] sm:$0xff]
  %v18 = vld [vmem:[%s0 + $0x20] sm:$0xff]
  %v19 = vld [vmem:[%s0 + $0x28] sm:$0xff]
  %v20 = vld [vmem:[%s0 + $0x30] sm:$0xff]
  %v21 = vld [vmem:[%s0 + $0x38] sm:$0xff]
  %v22 = vld [vmem:[%s0 + $0x40] sm:$0xff]
  %v23 = vld [vmem:[%s0 + $0x48] sm:$0xff]
  %v24 = vld [vmem:[%s0 + $0x50] sm:$0xff]
  %v25 = vld [vmem:[%s0 + $0x58] sm:$0xff]
  %v26 = vld [vmem:[%s0 + $0x60] sm:$0xff]
  %v27 = vld [vmem:[%s0 + $0x68] sm:$0xff]
  %v28 = vld [vmem:[%s0 + $0x70] sm:$0xff]
  %v29 = vld [vmem:[%s0 + $0x78] sm:$0xff]
  %v30 = vld [vmem:[%s1] sm:$0x1]
  %v32 = vlaneseq
  %v33 = vshrl.u32 %v32, 7
  %v34 = vsub.s32 0, %v33
  %v35 = vrot.slane %v30, %v34
  %v37 = vmul.f32 %v14, %v35
  %v38 = vmul.f32 %v15, %v35
  %v39 = vmul.f32 %v16, %v35
  %v40 = vmul.f32 %v17, %v35
  %v41 = vmul.f32 %v18, %v35
  %v42 = vmul.f32 %v19, %v35
  %v43 = vmul.f32 %v20, %v35
  %v44 = vmul.f32 %v21, %v35
  %v45 = vmul.f32 %v22, %v35
  %v46 = vmul.f32 %v23, %v35
  %v47 = vmul.f32 %v24, %v35
  %v48 = vmul.f32 %v25, %v35
  %v49 = vmul.f32 %v26, %v35
  %v50 = vmul.f32 %v27, %v35
  %v51 = vmul.f32 %v28, %v35
  %v52 = vmul.f32 %v29, %v35
  %v53 = vld [vmem:[%s2] sm:$0x1]
  %v55 = vlaneseq
  %v56 = vshrl.u32 %v55, 7
  %v57 = vsub.s32 0, %v56
  %v58 = vrot.slane %v53, %v57
  %v60 = vadd.f32 %v37, %v58
  %v61 = vadd.f32 %v38, %v58
  %v62 = vadd.f32 %v39, %v58
  %v63 = vadd.f32 %v40, %v58
  %v64 = vadd.f32 %v41, %v58
  %v65 = vadd.f32 %v42, %v58
  %v66 = vadd.f32 %v43, %v58
  %v67 = vadd.f32 %v44, %v58
  %v68 = vadd.f32 %v45, %v58
  %v69 = vadd.f32 %v46, %v58
  %v70 = vadd.f32 %v47, %v58
  %v71 = vadd.f32 %v48, %v58
  %v72 = vadd.f32 %v49, %v58
  %v73 = vadd.f32 %v50, %v58
  %v74 = vadd.f32 %v51, %v58
  %v75 = vadd.f32 %v52, %v58
  %v76 = vmax.f32 %v60, 0.0
  %v77 = vmax.f32 %v61, 0.0
  %v78 = vmax.f32 %v62, 0.0
  %v79 = vmax.f32 %v63, 0.0
  %v80 = vmax.f32 %v64, 0.0
  %v81 = vmax.f32 %v65, 0.0
  %v82 = vmax.f32 %v66, 0.0
  %v83 = vmax.f32 %v67, 0.0
  %v84 = vmax.f32 %v68, 0.0
  %v85 = vmax.f32 %v69, 0.0
  %v86 = vmax.f32 %v70, 0.0
  %v87 = vmax.f32 %v71, 0.0
  %v88 = vmax.f32 %v72, 0.0
  %v89 = vmax.f32 %v73, 0.0
  %v90 = vmax.f32 %v74, 0.0
  %v91 = vmax.f32 %v75, 0.0
  %92 = vst [vmem:[%s3] sm:$0xff] %v76
  %93 = vst [vmem:[%s3 + $0x8] sm:$0xff] %v77
  %94 = vst [vmem:[%s3 + $0x10] sm:$0xff] %v78
  %95 = vst [vmem:[%s3 + $0x18] sm:$0xff] %v79
  %96 = vst [vmem:[%s3 + $0x20] sm:$0xff] %v80
  %97 = vst [vmem:[%s3 + $0x28] sm:$0xff] %v81
  %98 = vst [vmem:[%s3 + $0x30] sm:$0xff] %v82
  %99 = vst [vmem:[%s3 + $0x38] sm:$0xff] %v83
  %100 = vst [vmem:[%s3 + $0x40] sm:$0xff] %v84
  %101 = vst [vmem:[%s3 + $0x48] sm:$0xff] %v85
  %102 = vst [vmem:[%s3 + $0x50] sm:$0xff] %v86
  %103 = vst [vmem:[%s3 + $0x58] sm:$0xff] %v87
  %104 = vst [vmem:[%s3 + $0x60] sm:$0xff] %v88
  %105 = vst [vmem:[%s3 + $0x68] sm:$0xff] %v89
  %106 = vst [vmem:[%s3 + $0x70] sm:$0xff] %v90
  %107 = vst [vmem:[%s3 + $0x78] sm:$0xff] %v91
  // Predicated region
  $region14: #{_lambda_.10} parent=0 // pred_check
    _
  $region15: #{_lambda_.10} parent=0 // pred_check_branch
    %109 = sbr.rel (0) target = $region17
  $region16: #{_lambda_.10} parent=0 // pred_region
    _
  $region17: #{_lambda_.10} parent=0 // pred_fallthru
    _
  // Predicated region
  $region18: #{_lambda_.10} parent=0 // pred_check
    _
  $region19: #{_lambda_.10} parent=0 // pred_check_branch
    %111 = sbr.rel (0) target = $region21
  $region20: #{_lambda_.10} parent=0 // pred_region
    _
  $region21: #{_lambda_.10} parent=0 // pred_fallthru
    _

// kernel: _lambda_.9
$region0: #{_lambda_.9}
  #allocation0 [shape = 'u32[]', space=smem, size = 0x4, offset = 0x4, fixed_abs, tag = 'smem constant byte address 0x4 - core index']
  #allocation1 [shape = 'u32[144,128]{1,0:T(1,128)}', space=vmem, size = 0x12000, scoped, tag = 'internal scratch']
  %s0 = inlined_call_operand.vmem [shape: bf16[128,64], index: 0, kind: input, shape index: {}]
  %s1 = inlined_call_operand.vmem [shape: bf16[64,128], index: 1, kind: input, shape index: {}]
  %s2 = inlined_call_operand.vmem [shape: f32[128,128], index: 2, kind: output, shape index: {0}]
  %s3 = inlined_call_operand.vmem [shape: f32[8,128], index: 3, kind: output, shape index: {1}]
  %4 = xla_tuple %s2, %s3
  %s5 = sld [smem:[#allocation0]]
  $region26: #{_lambda_.9} parent=0
    _
  %s7 = ssub.s32 1, %s5
  %s8 = scalar_select 0, %s7, %s5
  // Predicated region
  $region2: #{_lambda_.9} parent=0 // pred_check
    _
  $region3: #{_lambda_.9} parent=0 // pred_check_branch
    %10 = sbr.rel (0) target = $region5
  $region4: #{_lambda_.9} parent=0 // pred_region
    _
  $region5: #{_lambda_.9} parent=0 // pred_fallthru
    _
  // Predicated region
  $region6: #{_lambda_.9} parent=0 // pred_check
    _
  $region7: #{_lambda_.9} parent=0 // pred_check_branch
    %12 = sbr.rel (0) target = $region9
  $region8: #{_lambda_.9} parent=0 // pred_region
    _
  $region9: #{_lambda_.9} parent=0 // pred_fallthru
    _
  %v14 = vld [vmem:[%s0] sm:$0xf]
  %v15 = vld [vmem:[%s0 + $0x4] sm:$0xf]
  %v16 = vld [vmem:[%s0 + $0x8] sm:$0xf]
  %v17 = vld [vmem:[%s0 + $0xc] sm:$0xf]
  %v18 = vld [vmem:[%s0 + $0x10] sm:$0xf]
  %v19 = vld [vmem:[%s0 + $0x14] sm:$0xf]
  %v20 = vld [vmem:[%s0 + $0x18] sm:$0xf]
  %v21 = vld [vmem:[%s0 + $0x1c] sm:$0xf]
  %v22 = vld [vmem:[%s0 + $0x20] sm:$0xf]
  %v23 = vld [vmem:[%s0 + $0x24] sm:$0xf]
  %v24 = vld [vmem:[%s0 + $0x28] sm:$0xf]
  %v25 = vld [vmem:[%s0 + $0x2c] sm:$0xf]
  %v26 = vld [vmem:[%s0 + $0x30] sm:$0xf]
  %v27 = vld [vmem:[%s0 + $0x34] sm:$0xf]
  %v28 = vld [vmem:[%s0 + $0x38] sm:$0xf]
  %v29 = vld [vmem:[%s0 + $0x3c] sm:$0xf]
  %v30 = vld [vmem:[%s1] sm:$0xf]
  %v31 = vld [vmem:[%s1 + $0x4] sm:$0xf]
  %v32 = vld [vmem:[%s1 + $0x8] sm:$0xf]
  %v33 = vld [vmem:[%s1 + $0xc] sm:$0xf]
  %v34 = vld [vmem:[%s1 + $0x10] sm:$0xf]
  %v35 = vld [vmem:[%s1 + $0x14] sm:$0xf]
  %v36 = vld [vmem:[%s1 + $0x18] sm:$0xf]
  %v37 = vld [vmem:[%s1 + $0x1c] sm:$0xf]
  %v54 = vunpack.c.l.b16 %v14
  %v55 = vunpack.c.l.b16 %v15
  %v56 = vunpack.c.l.b16 %v16
  %v57 = vunpack.c.l.b16 %v17
  %v58 = vunpack.c.l.b16 %v18
  %v59 = vunpack.c.l.b16 %v19
  %v60 = vunpack.c.l.b16 %v20
  %v61 = vunpack.c.l.b16 %v21
  %v62 = vunpack.c.l.b16 %v22
  %v63 = vunpack.c.l.b16 %v23
  %v64 = vunpack.c.l.b16 %v24
  %v65 = vunpack.c.l.b16 %v25
  %v66 = vunpack.c.l.b16 %v26
  %v67 = vunpack.c.l.b16 %v27
  %v68 = vunpack.c.l.b16 %v28
  %v69 = vunpack.c.l.b16 %v29
  %v70 = vpack.c.b16 %v55, %v54
  %v71 = vpack.c.b16 %v57, %v56
  %v72 = vpack.c.b16 %v59, %v58
  %v73 = vpack.c.b16 %v61, %v60
  %v74 = vpack.c.b16 %v63, %v62
  %v75 = vpack.c.b16 %v65, %v64
  %v76 = vpack.c.b16 %v67, %v66
  %v77 = vpack.c.b16 %v69, %v68
  %v86 = vunpack.c.l.b16 %v30
  %v87 = vunpack.c.l.b16 %v31
  %v88 = vunpack.c.l.b16 %v32
  %v89 = vunpack.c.l.b16 %v33
  %v90 = vunpack.c.l.b16 %v34
  %v91 = vunpack.c.l.b16 %v35
  %v92 = vunpack.c.l.b16 %v36
  %v93 = vunpack.c.l.b16 %v37
  %v94 = vpack.c.b16 %v87, %v86
  %v95 = vpack.c.b16 %v89, %v88
  %v96 = vpack.c.b16 %v91, %v90
  %v97 = vpack.c.b16 %v93, %v92
  %vm102 = vcmask 523264
  %v104 = vsel %vm102, %v70, 0
  %v107 = vsel %vm102, %v71, 0
  %v110 = vsel %vm102, %v72, 0
  %v113 = vsel %vm102, %v73, 0
  %v116 = vsel %vm102, %v74, 0
  %v119 = vsel %vm102, %v75, 0
  %v122 = vsel %vm102, %v76, 0
  %v125 = vsel %vm102, %v77, 0
  %127 = vmatprep.subr.bf16.mxu0 0
  %128 = vmatpush1.bf16.msra.mxu0 %v94
  %129 = vmatprep.subr.bf16.mxu0 0
  %130 = vmatpush1.bf16.msra.mxu0 %v95
  %131 = vmatprep.subr.bf16.mxu0 0
  %132 = vmatpush1.bf16.msra.mxu0 %v96
  %133 = vmatprep.subr.bf16.mxu0 0
  %134 = vmatpush1.bf16.msra.mxu0 %v97
  %135 = vmatprep.subr.bf16.mxu0 0
  %136 = vmatpush1.bf16.msra.mxu0 0
  %137 = vmatprep.subr.bf16.mxu0 0
  %138 = vmatpush1.bf16.msra.mxu0 0
  %139 = vmatprep.subr.bf16.mxu0 0
  %140 = vmatpush1.bf16.msra.mxu0 0
  %141 = vmatprep.subr.bf16.mxu0 0
  %142 = vmatpush1.bf16.msra.mxu0 0
  %143 = vmatprep.subr.bf16.mxu0 0
  %144 = vmatpush1.bf16.msra.mxu0 0
  %145 = vmatprep.subr.bf16.mxu0 0
  %146 = vmatpush1.bf16.msra.mxu0 0
  %147 = vmatprep.subr.bf16.mxu0 0
  %148 = vmatpush1.bf16.msra.mxu0 0
  %149 = vmatprep.subr.bf16.mxu0 0
  %150 = vmatpush1.bf16.msra.mxu0 0
  %151 = vmatprep.subr.bf16.mxu0 0
  %152 = vmatpush1.bf16.msra.mxu0 0
  %153 = vmatprep.subr.bf16.mxu0 0
  %154 = vmatpush1.bf16.msra.mxu0 0
  %155 = vmatprep.subr.bf16.mxu0 0
  %156 = vmatpush1.bf16.msra.mxu0 0
  %157 = vmatprep.subr.bf16.mxu0 0
  %158 = vmatpush1.bf16.msra.mxu0 0
  %159 = vmatprep.mubr.bf16.mxu0 0
  %160 = vmatmul.mubr.bf16.gmra.mrb[0].mxu0 %v104
  %v161 = vpop.f32.mrb[0].mxu0
  %v162 = vadd.f32 0.0, %v161
  %v163 = vpop.f32.mrb[0].mxu0
  %v164 = vpop.f32.mrb[0].mxu0
  %v165 = vadd.f32 0.0, %v164
  %v166 = vpop.f32.mrb[0].mxu0
  %167 = vmatprep.mubr.bf16.mxu0 0
  %168 = vmatmul.mubr.bf16.gmra.mrb[0].mxu0 %v107
  %v169 = vpop.f32.mrb[0].mxu0
  %v170 = vadd.f32 0.0, %v169
  %v171 = vpop.f32.mrb[0].mxu0
  %v172 = vpop.f32.mrb[0].mxu0
  %v173 = vadd.f32 0.0, %v172
  %v174 = vpop.f32.mrb[0].mxu0
  %175 = vmatprep.mubr.bf16.mxu0 0
  %176 = vmatmul.mubr.bf16.gmra.mrb[0].mxu0 %v110
  %v177 = vpop.f32.mrb[0].mxu0
  %v178 = vadd.f32 0.0, %v177
  %v179 = vpop.f32.mrb[0].mxu0
  %v180 = vpop.f32.mrb[0].mxu0
  %v181 = vadd.f32 0.0, %v180
  %v182 = vpop.f32.mrb[0].mxu0
  %183 = vmatprep.mubr.bf16.mxu0 0
  %184 = vmatmul.mubr.bf16.gmra.mrb[0].mxu0 %v113
  %v185 = vpop.f32.mrb[0].mxu0
  %v186 = vadd.f32 0.0, %v185
  %v187 = vpop.f32.mrb[0].mxu0
  %v188 = vpop.f32.mrb[0].mxu0
  %v189 = vadd.f32 0.0, %v188
  %v190 = vpop.f32.mrb[0].mxu0
  %191 = vmatprep.mubr.bf16.mxu0 0
  %192 = vmatmul.mubr.bf16.gmra.mrb[0].mxu0 %v116
  %v193 = vpop.f32.mrb[0].mxu0
  %v194 = vadd.f32 0.0, %v193
  %v195 = vpop.f32.mrb[0].mxu0
  %v196 = vpop.f32.mrb[0].mxu0
  %v197 = vadd.f32 0.0, %v196
  %v198 = vpop.f32.mrb[0].mxu0
  %199 = vmatprep.mubr.bf16.mxu0 0
  %200 = vmatmul.mubr.bf16.gmra.mrb[0].mxu0 %v119
  %v201 = vpop.f32.mrb[0].mxu0
  %v202 = vadd.f32 0.0, %v201
  %v203 = vpop.f32.mrb[0].mxu0
  %v204 = vpop.f32.mrb[0].mxu0
  %v205 = vadd.f32 0.0, %v204
  %v206 = vpop.f32.mrb[0].mxu0
  %207 = vmatprep.mubr.bf16.mxu0 0
  %208 = vmatmul.mubr.bf16.gmra.mrb[0].mxu0 %v122
  %v209 = vpop.f32.mrb[0].mxu0
  %v210 = vadd.f32 0.0, %v209
  %v211 = vpop.f32.mrb[0].mxu0
  %v212 = vpop.f32.mrb[0].mxu0
  %v213 = vadd.f32 0.0, %v212
  %v214 = vpop.f32.mrb[0].mxu0
  %215 = vmatprep.mubr.bf16.mxu0 0
  %216 = vmatmul.mubr.bf16.gmra.mrb[0].mxu0 %v125
  %v217 = vpop.f32.mrb[0].mxu0
  %v218 = vadd.f32 0.0, %v217
  %v219 = vpop.f32.mrb[0].mxu0
  %v220 = vpop.f32.mrb[0].mxu0
  %v221 = vadd.f32 0.0, %v220
  %v222 = vpop.f32.mrb[0].mxu0
  %223 = vdwg.mxu0
  %224 = vst [vmem:[%s2] sm:$0xff] %v162
  %225 = vst [vmem:[%s2 + $0x8] sm:$0xff] %v165
  %226 = vst [vmem:[%s2 + $0x10] sm:$0xff] %v170
  %227 = vst [vmem:[%s2 + $0x18] sm:$0xff] %v173
  %228 = vst [vmem:[%s2 + $0x20] sm:$0xff] %v178
  %229 = vst [vmem:[%s2 + $0x28] sm:$0xff] %v181
  %230 = vst [vmem:[%s2 + $0x30] sm:$0xff] %v186
  %231 = vst [vmem:[%s2 + $0x38] sm:$0xff] %v189
  %232 = vst [vmem:[%s2 + $0x40] sm:$0xff] %v194
  %233 = vst [vmem:[%s2 + $0x48] sm:$0xff] %v197
  %234 = vst [vmem:[%s2 + $0x50] sm:$0xff] %v202
  %235 = vst [vmem:[%s2 + $0x58] sm:$0xff] %v205
  %236 = vst [vmem:[%s2 + $0x60] sm:$0xff] %v210
  %237 = vst [vmem:[%s2 + $0x68] sm:$0xff] %v213
  %238 = vst [vmem:[%s2 + $0x70] sm:$0xff] %v218
  %239 = vst [vmem:[%s2 + $0x78] sm:$0xff] %v221
  %v240 = vadd.f32 %v162, %v165
  %v241 = vadd.f32 %v240, %v170
  %v242 = vadd.f32 %v241, %v173
  %v243 = vadd.f32 %v242, %v178
  %v244 = vadd.f32 %v243, %v181
  %v245 = vadd.f32 %v244, %v186
  %v246 = vadd.f32 %v245, %v189
  %v247 = vadd.f32 %v246, %v194
  %v248 = vadd.f32 %v247, %v197
  %v249 = vadd.f32 %v248, %v202
  %v250 = vadd.f32 %v249, %v205
  %v251 = vadd.f32 %v250, %v210
  %v252 = vadd.f32 %v251, %v213
  %v253 = vadd.f32 %v252, %v218
  %v254 = vadd.f32 %v253, %v221
  %v255 = vrot.slane %v254, 4
  %v256 = vadd.f32 %v254, %v255
  %v257 = vrot.slane %v256, 2
  %v258 = vadd.f32 %v256, %v257
  %v259 = vrot.slane %v258, 1
  %v260 = vadd.f32 %v258, %v259
  %v261 = vmul.f32 %v162, %v162
  %v262 = vmul.f32 %v165, %v165
  %v263 = vmul.f32 %v170, %v170
  %v264 = vmul.f32 %v173, %v173
  %v265 = vmul.f32 %v178, %v178
  %v266 = vmul.f32 %v181, %v181
  %v267 = vmul.f32 %v186, %v186
  %v268 = vmul.f32 %v189, %v189
  %v269 = vmul.f32 %v194, %v194
  %v270 = vmul.f32 %v197, %v197
  %v271 = vmul.f32 %v202, %v202
  %v272 = vmul.f32 %v205, %v205
  %v273 = vmul.f32 %v210, %v210
  %v274 = vmul.f32 %v213, %v213
  %v275 = vmul.f32 %v218, %v218
  %v276 = vmul.f32 %v221, %v221
  %v277 = vadd.f32 %v261, %v262
  %v278 = vadd.f32 %v277, %v263
  %v279 = vadd.f32 %v278, %v264
  %v280 = vadd.f32 %v279, %v265
  %v281 = vadd.f32 %v280, %v266
  %v282 = vadd.f32 %v281, %v267
  %v283 = vadd.f32 %v282, %v268
  %v284 = vadd.f32 %v283, %v269
  %v285 = vadd.f32 %v284, %v270
  %v286 = vadd.f32 %v285, %v271
  %v287 = vadd.f32 %v286, %v272
  %v288 = vadd.f32 %v287, %v273
  %v289 = vadd.f32 %v288, %v274
  %v290 = vadd.f32 %v289, %v275
  %v291 = vadd.f32 %v290, %v276
  %v292 = vrot.slane %v291, 4
  %v293 = vadd.f32 %v291, %v292
  %v294 = vrot.slane %v293, 2
  %v295 = vadd.f32 %v293, %v294
  %v296 = vrot.slane %v295, 1
  %v297 = vadd.f32 %v295, %v296
  %vm298 = vcmask 1040384
  %v299 = vsel %vm298, %v260, %v297
  %vm300 = vcmask 1041408
  %v301 = vsel %vm300, %v299, 0.0
  %302 = vst [vmem:[%s3] sm:$0xff] %v301
  // Predicated region
  $region10: #{_lambda_.9} parent=0 // pred_check
    _
  $region11: #{_lambda_.9} parent=0 // pred_check_branch
    %304 = sbr.rel (0) target = $region13
  $region12: #{_lambda_.9} parent=0 // pred_region
    _
  $region13: #{_lambda_.9} parent=0 // pred_fallthru
    _
  // Predicated region
  $region14: #{_lambda_.9} parent=0 // pred_check
    _
  $region15: #{_lambda_.9} parent=0 // pred_check_branch
    %306 = sbr.rel (0) target = $region17
  $region16: #{_lambda_.9} parent=0 // pred_region
    _
  $region17: #{_lambda_.9} parent=0 // pred_fallthru
    _
  // Predicated region
  $region18: #{_lambda_.9} parent=0 // pred_check
    _
  $region19: #{_lambda_.9} parent=0 // pred_check_branch
    %308 = sbr.rel (0) target = $region21
  $region20: #{_lambda_.9} parent=0 // pred_region
    _
  $region21: #{_lambda_.9} parent=0 // pred_fallthru
    _
  // Predicated region
  $region22: #{_lambda_.9} parent=0 // pred_check
    _
  $region23: #{_lambda_.9} parent=0 // pred_check_branch
    %310 = sbr.rel (0) target = $region25
  $region24: #{_lambda_.9} parent=0 // pred_region
    _
  $region25: #{_lambda_.9} parent=0 // pred_fallthru
    _

// kernel: _lambda_.12
$region0: #{_lambda_.12}
  #allocation0 [shape = 'u32[]', space=smem, size = 0x4, offset = 0x4, fixed_abs, tag = 'smem constant byte address 0x4 - core index']
  #allocation1 [shape = 'u32[144,128]{1,0:T(1,128)}', space=vmem, size = 0x12000, scoped, tag = 'internal scratch']
  %s0 = inlined_call_operand.vmem [shape: f32[32,128], index: 0, kind: input, shape index: {}]
  %s1 = inlined_call_operand.vmem [shape: f32[1,128], index: 1, kind: input, shape index: {}]
  %s2 = inlined_call_operand.vmem [shape: f32[1,128], index: 2, kind: input, shape index: {}]
  %s3 = inlined_call_operand.vmem [shape: f32[32,128], index: 3, kind: output, shape index: {}]
  %s4 = sld [smem:[#allocation0]]
  $region22: #{_lambda_.12} parent=0
    _
  %s6 = ssub.s32 1, %s4
  %s7 = scalar_select 0, %s6, %s4
  // Predicated region
  $region2: #{_lambda_.12} parent=0 // pred_check
    _
  $region3: #{_lambda_.12} parent=0 // pred_check_branch
    %9 = sbr.rel (0) target = $region5
  $region4: #{_lambda_.12} parent=0 // pred_region
    _
  $region5: #{_lambda_.12} parent=0 // pred_fallthru
    _
  // Predicated region
  $region6: #{_lambda_.12} parent=0 // pred_check
    _
  $region7: #{_lambda_.12} parent=0 // pred_check_branch
    %11 = sbr.rel (0) target = $region9
  $region8: #{_lambda_.12} parent=0 // pred_region
    _
  $region9: #{_lambda_.12} parent=0 // pred_fallthru
    _
  // Predicated region
  $region10: #{_lambda_.12} parent=0 // pred_check
    _
  $region11: #{_lambda_.12} parent=0 // pred_check_branch
    %13 = sbr.rel (0) target = $region13
  $region12: #{_lambda_.12} parent=0 // pred_region
    _
  $region13: #{_lambda_.12} parent=0 // pred_fallthru
    _
  %v14 = vld [vmem:[%s0] sm:$0xff]
  %v15 = vld [vmem:[%s0 + $0x8] sm:$0xff]
  %v16 = vld [vmem:[%s0 + $0x10] sm:$0xff]
  %v17 = vld [vmem:[%s0 + $0x18] sm:$0xff]
  %v18 = vld [vmem:[%s1] sm:$0x1]
  %v20 = vlaneseq
  %v21 = vshrl.u32 %v20, 7
  %v22 = vsub.s32 0, %v21
  %v23 = vrot.slane %v18, %v22
  %v25 = vmul.f32 %v14, %v23
  %v26 = vmul.f32 %v15, %v23
  %v27 = vmul.f32 %v16, %v23
  %v28 = vmul.f32 %v17, %v23
  %v29 = vld [vmem:[%s2] sm:$0x1]
  %v31 = vlaneseq
  %v32 = vshrl.u32 %v31, 7
  %v33 = vsub.s32 0, %v32
  %v34 = vrot.slane %v29, %v33
  %v36 = vadd.f32 %v25, %v34
  %v37 = vadd.f32 %v26, %v34
  %v38 = vadd.f32 %v27, %v34
  %v39 = vadd.f32 %v28, %v34
  %v40 = vmax.f32 %v36, 0.0
  %v41 = vmax.f32 %v37, 0.0
  %v42 = vmax.f32 %v38, 0.0
  %v43 = vmax.f32 %v39, 0.0
  %44 = vst [vmem:[%s3] sm:$0xff] %v40
  %45 = vst [vmem:[%s3 + $0x8] sm:$0xff] %v41
  %46 = vst [vmem:[%s3 + $0x10] sm:$0xff] %v42
  %47 = vst [vmem:[%s3 + $0x18] sm:$0xff] %v43
  // Predicated region
  $region14: #{_lambda_.12} parent=0 // pred_check
    _
  $region15: #{_lambda_.12} parent=0 // pred_check_branch
    %49 = sbr.rel (0) target = $region17
  $region16: #{_lambda_.12} parent=0 // pred_region
    _
  $region17: #{_lambda_.12} parent=0 // pred_fallthru
    _
  // Predicated region
  $region18: #{_lambda_.12} parent=0 // pred_check
    _
  $region19: #{_lambda_.12} parent=0 // pred_check_branch
    %51 = sbr.rel (0) target = $region21
  $region20: #{_lambda_.12} parent=0 // pred_region
    _
  $region21: #{_lambda_.12} parent=0 // pred_fallthru
    _

// kernel: _lambda_.11
$region0: #{_lambda_.11}
  #allocation0 [shape = 'u32[]', space=smem, size = 0x4, offset = 0x4, fixed_abs, tag = 'smem constant byte address 0x4 - core index']
  #allocation1 [shape = 'u32[144,128]{1,0:T(1,128)}', space=vmem, size = 0x12000, scoped, tag = 'internal scratch']
  %s0 = inlined_call_operand.vmem [shape: bf16[32,128], index: 0, kind: input, shape index: {}]
  %s1 = inlined_call_operand.vmem [shape: bf16[128,128], index: 1, kind: input, shape index: {}]
  %s2 = inlined_call_operand.vmem [shape: f32[32,128], index: 2, kind: output, shape index: {0}]
  %s3 = inlined_call_operand.vmem [shape: f32[8,128], index: 3, kind: output, shape index: {1}]
  %4 = xla_tuple %s2, %s3
  %s5 = sld [smem:[#allocation0]]
  $region26: #{_lambda_.11} parent=0
    _
  %s7 = ssub.s32 1, %s5
  %s8 = scalar_select 0, %s7, %s5
  // Predicated region
  $region2: #{_lambda_.11} parent=0 // pred_check
    _
  $region3: #{_lambda_.11} parent=0 // pred_check_branch
    %10 = sbr.rel (0) target = $region5
  $region4: #{_lambda_.11} parent=0 // pred_region
    _
  $region5: #{_lambda_.11} parent=0 // pred_fallthru
    _
  // Predicated region
  $region6: #{_lambda_.11} parent=0 // pred_check
    _
  $region7: #{_lambda_.11} parent=0 // pred_check_branch
    %12 = sbr.rel (0) target = $region9
  $region8: #{_lambda_.11} parent=0 // pred_region
    _
  $region9: #{_lambda_.11} parent=0 // pred_fallthru
    _
  %v14 = vld [vmem:[%s0] sm:$0xf]
  %v15 = vld [vmem:[%s0 + $0x4] sm:$0xf]
  %v16 = vld [vmem:[%s0 + $0x8] sm:$0xf]
  %v17 = vld [vmem:[%s0 + $0xc] sm:$0xf]
  %v18 = vld [vmem:[%s1] sm:$0xf]
  %v19 = vld [vmem:[%s1 + $0x4] sm:$0xf]
  %v20 = vld [vmem:[%s1 + $0x8] sm:$0xf]
  %v21 = vld [vmem:[%s1 + $0xc] sm:$0xf]
  %v22 = vld [vmem:[%s1 + $0x10] sm:$0xf]
  %v23 = vld [vmem:[%s1 + $0x14] sm:$0xf]
  %v24 = vld [vmem:[%s1 + $0x18] sm:$0xf]
  %v25 = vld [vmem:[%s1 + $0x1c] sm:$0xf]
  %v26 = vld [vmem:[%s1 + $0x20] sm:$0xf]
  %v27 = vld [vmem:[%s1 + $0x24] sm:$0xf]
  %v28 = vld [vmem:[%s1 + $0x28] sm:$0xf]
  %v29 = vld [vmem:[%s1 + $0x2c] sm:$0xf]
  %v30 = vld [vmem:[%s1 + $0x30] sm:$0xf]
  %v31 = vld [vmem:[%s1 + $0x34] sm:$0xf]
  %v32 = vld [vmem:[%s1 + $0x38] sm:$0xf]
  %v33 = vld [vmem:[%s1 + $0x3c] sm:$0xf]
  %v38 = vunpack.c.l.b16 %v14
  %v39 = vunpack.c.l.b16 %v15
  %v40 = vunpack.c.l.b16 %v16
  %v41 = vunpack.c.l.b16 %v17
  %v42 = vpack.c.b16 %v39, %v38
  %v43 = vpack.c.b16 %v41, %v40
  %v62 = vunpack.c.l.b16 %v18
  %v63 = vunpack.c.l.b16 %v19
  %v64 = vunpack.c.l.b16 %v20
  %v65 = vunpack.c.l.b16 %v21
  %v66 = vunpack.c.l.b16 %v22
  %v67 = vunpack.c.l.b16 %v23
  %v68 = vunpack.c.l.b16 %v24
  %v69 = vunpack.c.l.b16 %v25
  %v70 = vunpack.c.l.b16 %v26
  %v71 = vunpack.c.l.b16 %v27
  %v72 = vunpack.c.l.b16 %v28
  %v73 = vunpack.c.l.b16 %v29
  %v74 = vunpack.c.l.b16 %v30
  %v75 = vunpack.c.l.b16 %v31
  %v76 = vunpack.c.l.b16 %v32
  %v77 = vunpack.c.l.b16 %v33
  %v78 = vpack.c.b16 %v63, %v62
  %v79 = vpack.c.b16 %v65, %v64
  %v80 = vpack.c.b16 %v67, %v66
  %v81 = vpack.c.b16 %v69, %v68
  %v82 = vpack.c.b16 %v71, %v70
  %v83 = vpack.c.b16 %v73, %v72
  %v84 = vpack.c.b16 %v75, %v74
  %v85 = vpack.c.b16 %v77, %v76
  %94 = vmatprep.subr.bf16.mxu0 0
  %95 = vmatpush1.bf16.msra.mxu0 %v78
  %96 = vmatprep.subr.bf16.mxu0 0
  %97 = vmatpush1.bf16.msra.mxu0 %v79
  %98 = vmatprep.subr.bf16.mxu0 0
  %99 = vmatpush1.bf16.msra.mxu0 %v80
  %100 = vmatprep.subr.bf16.mxu0 0
  %101 = vmatpush1.bf16.msra.mxu0 %v81
  %102 = vmatprep.subr.bf16.mxu0 0
  %103 = vmatpush1.bf16.msra.mxu0 %v82
  %104 = vmatprep.subr.bf16.mxu0 0
  %105 = vmatpush1.bf16.msra.mxu0 %v83
  %106 = vmatprep.subr.bf16.mxu0 0
  %107 = vmatpush1.bf16.msra.mxu0 %v84
  %108 = vmatprep.subr.bf16.mxu0 0
  %109 = vmatpush1.bf16.msra.mxu0 %v85
  %110 = vmatprep.subr.bf16.mxu0 0
  %111 = vmatpush1.bf16.msra.mxu0 0
  %112 = vmatprep.subr.bf16.mxu0 0
  %113 = vmatpush1.bf16.msra.mxu0 0
  %114 = vmatprep.subr.bf16.mxu0 0
  %115 = vmatpush1.bf16.msra.mxu0 0
  %116 = vmatprep.subr.bf16.mxu0 0
  %117 = vmatpush1.bf16.msra.mxu0 0
  %118 = vmatprep.subr.bf16.mxu0 0
  %119 = vmatpush1.bf16.msra.mxu0 0
  %120 = vmatprep.subr.bf16.mxu0 0
  %121 = vmatpush1.bf16.msra.mxu0 0
  %122 = vmatprep.subr.bf16.mxu0 0
  %123 = vmatpush1.bf16.msra.mxu0 0
  %124 = vmatprep.subr.bf16.mxu0 0
  %125 = vmatpush1.bf16.msra.mxu0 0
  %126 = vmatprep.mubr.bf16.mxu0 0
  %127 = vmatmul.mubr.bf16.gmra.mrb[0].mxu0 %v42
  %v128 = vpop.f32.mrb[0].mxu0
  %v129 = vadd.f32 0.0, %v128
  %v130 = vpop.f32.mrb[0].mxu0
  %v131 = vpop.f32.mrb[0].mxu0
  %v132 = vadd.f32 0.0, %v131
  %v133 = vpop.f32.mrb[0].mxu0
  %134 = vmatprep.mubr.bf16.mxu0 0
  %135 = vmatmul.mubr.bf16.gmra.mrb[0].mxu0 %v43
  %v136 = vpop.f32.mrb[0].mxu0
  %v137 = vadd.f32 0.0, %v136
  %v138 = vpop.f32.mrb[0].mxu0
  %v139 = vpop.f32.mrb[0].mxu0
  %v140 = vadd.f32 0.0, %v139
  %v141 = vpop.f32.mrb[0].mxu0
  %142 = vdwg.mxu0
  %143 = vst [vmem:[%s2] sm:$0xff] %v129
  %144 = vst [vmem:[%s2 + $0x8] sm:$0xff] %v132
  %145 = vst [vmem:[%s2 + $0x10] sm:$0xff] %v137
  %146 = vst [vmem:[%s2 + $0x18] sm:$0xff] %v140
  %v147 = vadd.f32 %v129, %v132
  %v148 = vadd.f32 %v147, %v137
  %v149 = vadd.f32 %v148, %v140
  %v150 = vrot.slane %v149, 4
  %v151 = vadd.f32 %v149, %v150
  %v152 = vrot.slane %v151, 2
  %v153 = vadd.f32 %v151, %v152
  %v154 = vrot.slane %v153, 1
  %v155 = vadd.f32 %v153, %v154
  %v156 = vmul.f32 %v129, %v129
  %v157 = vmul.f32 %v132, %v132
  %v158 = vmul.f32 %v137, %v137
  %v159 = vmul.f32 %v140, %v140
  %v160 = vadd.f32 %v156, %v157
  %v161 = vadd.f32 %v160, %v158
  %v162 = vadd.f32 %v161, %v159
  %v163 = vrot.slane %v162, 4
  %v164 = vadd.f32 %v162, %v163
  %v165 = vrot.slane %v164, 2
  %v166 = vadd.f32 %v164, %v165
  %v167 = vrot.slane %v166, 1
  %v168 = vadd.f32 %v166, %v167
  %vm169 = vcmask 1040384
  %v170 = vsel %vm169, %v155, %v168
  %vm171 = vcmask 1041408
  %v172 = vsel %vm171, %v170, 0.0
  %173 = vst [vmem:[%s3] sm:$0xff] %v172
  // Predicated region
  $region10: #{_lambda_.11} parent=0 // pred_check
    _
  $region11: #{_lambda_.11} parent=0 // pred_check_branch
    %175 = sbr.rel (0) target = $region13
  $region12: #{_lambda_.11} parent=0 // pred_region
    _
  $region13: #{_lambda_.11} parent=0 // pred_fallthru
    _
  // Predicated region
  $region14: #{_lambda_.11} parent=0 // pred_check
    _
  $region15: #{_lambda_.11} parent=0 // pred_check_branch
    %177 = sbr.rel (0) target = $region17
  $region16: #{_lambda_.11} parent=0 // pred_region
    _
  $region17: #{_lambda_.11} parent=0 // pred_fallthru
    _
  // Predicated region
  $region18: #{_lambda_.11} parent=0 // pred_check
    _
  $region19: #{_lambda_.11} parent=0 // pred_check_branch
    %179 = sbr.rel (0) target = $region21
  $region20: #{_lambda_.11} parent=0 // pred_region
    _
  $region21: #{_lambda_.11} parent=0 // pred_fallthru
    _
  // Predicated region
  $region22: #{_lambda_.11} parent=0 // pred_check
    _
  $region23: #{_lambda_.11} parent=0 // pred_check_branch
    %181 = sbr.rel (0) target = $region25
  $region24: #{_lambda_.11} parent=0 // pred_region
    _
  $region25: #{_lambda_.11} parent=0 // pred_fallthru
    _

// kernel: _lambda_.13
$region0: #{_lambda_.13}
  #allocation0 [shape = 'u32[]', space=smem, size = 0x4, offset = 0x4, fixed_abs, tag = 'smem constant byte address 0x4 - core index']
  #allocation1 [shape = 'u32[144,128]{1,0:T(1,128)}', space=vmem, size = 0x12000, scoped, tag = 'internal scratch']
  %s0 = inlined_call_operand.vmem [shape: bf16[32,144], index: 0, kind: input, shape index: {}]
  %s1 = inlined_call_operand.vmem [shape: bf16[144,128], index: 1, kind: input, shape index: {}]
  %s2 = inlined_call_operand.vmem [shape: f32[32,128], index: 2, kind: output, shape index: {0}]
  %s3 = inlined_call_operand.vmem [shape: f32[8,128], index: 3, kind: output, shape index: {1}]
  %4 = xla_tuple %s2, %s3
  %s5 = sld [smem:[#allocation0]]
  $region26: #{_lambda_.13} parent=0
    _
  %s7 = ssub.s32 1, %s5
  %s8 = scalar_select 0, %s7, %s5
  // Predicated region
  $region2: #{_lambda_.13} parent=0 // pred_check
    _
  $region3: #{_lambda_.13} parent=0 // pred_check_branch
    %10 = sbr.rel (0) target = $region5
  $region4: #{_lambda_.13} parent=0 // pred_region
    _
  $region5: #{_lambda_.13} parent=0 // pred_fallthru
    _
  // Predicated region
  $region6: #{_lambda_.13} parent=0 // pred_check
    _
  $region7: #{_lambda_.13} parent=0 // pred_check_branch
    %12 = sbr.rel (0) target = $region9
  $region8: #{_lambda_.13} parent=0 // pred_region
    _
  $region9: #{_lambda_.13} parent=0 // pred_fallthru
    _
  %v14 = vld [vmem:[%s0] sm:$0xff]
  %v15 = vld [vmem:[%s0 + $0x8] sm:$0xff]
  %v16 = vld [vmem:[%s0 + $0x10] sm:$0xff]
  %v17 = vld [vmem:[%s0 + $0x18] sm:$0xff]
  %v18 = vld [vmem:[%s1] sm:$0xf]
  %v19 = vld [vmem:[%s1 + $0x4] sm:$0xf]
  %v20 = vld [vmem:[%s1 + $0x8] sm:$0xf]
  %v21 = vld [vmem:[%s1 + $0xc] sm:$0xf]
  %v22 = vld [vmem:[%s1 + $0x10] sm:$0xf]
  %v23 = vld [vmem:[%s1 + $0x14] sm:$0xf]
  %v24 = vld [vmem:[%s1 + $0x18] sm:$0xf]
  %v25 = vld [vmem:[%s1 + $0x1c] sm:$0xf]
  %v26 = vld [vmem:[%s1 + $0x20] sm:$0xf]
  %v27 = vld [vmem:[%s1 + $0x24] sm:$0xf]
  %v28 = vld [vmem:[%s1 + $0x28] sm:$0xf]
  %v29 = vld [vmem:[%s1 + $0x2c] sm:$0xf]
  %v30 = vld [vmem:[%s1 + $0x30] sm:$0xf]
  %v31 = vld [vmem:[%s1 + $0x34] sm:$0xf]
  %v32 = vld [vmem:[%s1 + $0x38] sm:$0xf]
  %v33 = vld [vmem:[%s1 + $0x3c] sm:$0xf]
  %v34 = vld [vmem:[%s1 + $0x40] sm:$0xf]
  %v35 = vld [vmem:[%s1 + $0x44] sm:$0xf]
  %v40 = vunpack.c.l.b16 %v14
  %v41 = vunpack.c.h.b16 %v14
  %v42 = vunpack.c.l.b16 %v15
  %v43 = vunpack.c.h.b16 %v15
  %v44 = vunpack.c.l.b16 %v16
  %v45 = vunpack.c.h.b16 %v16
  %v46 = vunpack.c.l.b16 %v17
  %v47 = vunpack.c.h.b16 %v17
  %v48 = vpack.c.b16 %v42, %v40
  %v49 = vpack.c.b16 %v43, %v41
  %v50 = vpack.c.b16 %v46, %v44
  %v51 = vpack.c.b16 %v47, %v45
  %v72 = vunpack.c.l.b16 %v18
  %v73 = vunpack.c.l.b16 %v19
  %v74 = vunpack.c.l.b16 %v20
  %v75 = vunpack.c.l.b16 %v21
  %v76 = vunpack.c.l.b16 %v22
  %v77 = vunpack.c.l.b16 %v23
  %v78 = vunpack.c.l.b16 %v24
  %v79 = vunpack.c.l.b16 %v25
  %v80 = vunpack.c.l.b16 %v26
  %v81 = vunpack.c.l.b16 %v27
  %v82 = vunpack.c.l.b16 %v28
  %v83 = vunpack.c.l.b16 %v29
  %v84 = vunpack.c.l.b16 %v30
  %v85 = vunpack.c.l.b16 %v31
  %v86 = vunpack.c.l.b16 %v32
  %v87 = vunpack.c.l.b16 %v33
  %v88 = vunpack.c.l.b16 %v34
  %v89 = vunpack.c.l.b16 %v35
  %v90 = vpack.c.b16 %v73, %v72
  %v91 = vpack.c.b16 %v75, %v74
  %v92 = vpack.c.b16 %v77, %v76
  %v93 = vpack.c.b16 %v79, %v78
  %v94 = vpack.c.b16 %v81, %v80
  %v95 = vpack.c.b16 %v83, %v82
  %v96 = vpack.c.b16 %v85, %v84
  %v97 = vpack.c.b16 %v87, %v86
  %v98 = vpack.c.b16 %v89, %v88
  %vm108 = vcmask 130048
  %v110 = vsel %vm108, %v49, 0
  %v113 = vsel %vm108, %v51, 0
  %115 = vmatprep.subr.bf16.mxu0 0
  %116 = vmatpush1.bf16.msra.mxu0 %v90
  %117 = vmatprep.subr.bf16.mxu0 0
  %118 = vmatpush1.bf16.msra.mxu0 %v91
  %119 = vmatprep.subr.bf16.mxu0 0
  %120 = vmatpush1.bf16.msra.mxu0 %v92
  %121 = vmatprep.subr.bf16.mxu0 0
  %122 = vmatpush1.bf16.msra.mxu0 %v93
  %123 = vmatprep.subr.bf16.mxu0 0
  %124 = vmatpush1.bf16.msra.mxu0 %v94
  %125 = vmatprep.subr.bf16.mxu0 0
  %126 = vmatpush1.bf16.msra.mxu0 %v95
  %127 = vmatprep.subr.bf16.mxu0 0
  %128 = vmatpush1.bf16.msra.mxu0 %v96
  %129 = vmatprep.subr.bf16.mxu0 0
  %130 = vmatpush1.bf16.msra.mxu0 %v97
  %131 = vmatprep.subr.bf16.mxu0 0
  %132 = vmatpush1.bf16.msra.mxu0 %v98
  %133 = vmatprep.subr.bf16.mxu0 0
  %134 = vmatpush1.bf16.msra.mxu0 0
  %135 = vmatprep.subr.bf16.mxu0 0
  %136 = vmatpush1.bf16.msra.mxu0 0
  %137 = vmatprep.subr.bf16.mxu0 0
  %138 = vmatpush1.bf16.msra.mxu0 0
  %139 = vmatprep.subr.bf16.mxu0 0
  %140 = vmatpush1.bf16.msra.mxu0 0
  %141 = vmatprep.subr.bf16.mxu0 0
  %142 = vmatpush1.bf16.msra.mxu0 0
  %143 = vmatprep.subr.bf16.mxu0 0
  %144 = vmatpush1.bf16.msra.mxu0 0
  %145 = vmatprep.subr.bf16.mxu0 0
  %146 = vmatpush1.bf16.msra.mxu0 0
  %147 = vmatprep.mubr.bf16.mxu0 %v110
  %148 = vmatmul.mubr.bf16.gmra.mrb[0].mxu0 %v48
  %v149 = vpop.f32.mrb[0].mxu0
  %v150 = vadd.f32 0.0, %v149
  %v151 = vpop.f32.mrb[0].mxu0
  %v152 = vpop.f32.mrb[0].mxu0
  %v153 = vadd.f32 0.0, %v152
  %v154 = vpop.f32.mrb[0].mxu0
  %155 = vmatprep.mubr.bf16.mxu0 %v113
  %156 = vmatmul.mubr.bf16.gmra.mrb[0].mxu0 %v50
  %v157 = vpop.f32.mrb[0].mxu0
  %v158 = vadd.f32 0.0, %v157
  %v159 = vpop.f32.mrb[0].mxu0
  %v160 = vpop.f32.mrb[0].mxu0
  %v161 = vadd.f32 0.0, %v160
  %v162 = vpop.f32.mrb[0].mxu0
  %163 = vdwg.mxu0
  %164 = vst [vmem:[%s2] sm:$0xff] %v150
  %165 = vst [vmem:[%s2 + $0x8] sm:$0xff] %v153
  %166 = vst [vmem:[%s2 + $0x10] sm:$0xff] %v158
  %167 = vst [vmem:[%s2 + $0x18] sm:$0xff] %v161
  %v168 = vadd.f32 %v150, %v153
  %v169 = vadd.f32 %v168, %v158
  %v170 = vadd.f32 %v169, %v161
  %v171 = vrot.slane %v170, 4
  %v172 = vadd.f32 %v170, %v171
  %v173 = vrot.slane %v172, 2
  %v174 = vadd.f32 %v172, %v173
  %v175 = vrot.slane %v174, 1
  %v176 = vadd.f32 %v174, %v175
  %v177 = vmul.f32 %v150, %v150
  %v178 = vmul.f32 %v153, %v153
  %v179 = vmul.f32 %v158, %v158
  %v180 = vmul.f32 %v161, %v161
  %v181 = vadd.f32 %v177, %v178
  %v182 = vadd.f32 %v181, %v179
  %v183 = vadd.f32 %v182, %v180
  %v184 = vrot.slane %v183, 4
  %v185 = vadd.f32 %v183, %v184
  %v186 = vrot.slane %v185, 2
  %v187 = vadd.f32 %v185, %v186
  %v188 = vrot.slane %v187, 1
  %v189 = vadd.f32 %v187, %v188
  %vm190 = vcmask 1040384
  %v191 = vsel %vm190, %v176, %v189
  %vm192 = vcmask 1041408
  %v193 = vsel %vm192, %v191, 0.0
  %194 = vst [vmem:[%s3] sm:$0xff] %v193
  // Predicated region
  $region10: #{_lambda_.13} parent=0 // pred_check
    _
  $region11: #{_lambda_.13} parent=0 // pred_check_branch
    %196 = sbr.rel (0) target = $region13
  $region12: #{_lambda_.13} parent=0 // pred_region
    _
  $region13: #{_lambda_.13} parent=0 // pred_fallthru
    _
  // Predicated region
  $region14: #{_lambda_.13} parent=0 // pred_check
    _
  $region15: #{_lambda_.13} parent=0 // pred_check_branch
    %198 = sbr.rel (0) target = $region17
  $region16: #{_lambda_.13} parent=0 // pred_region
    _
  $region17: #{_lambda_.13} parent=0 // pred_fallthru
    _
  // Predicated region
  $region18: #{_lambda_.13} parent=0 // pred_check
    _
  $region19: #{_lambda_.13} parent=0 // pred_check_branch
    %200 = sbr.rel (0) target = $region21
  $region20: #{_lambda_.13} parent=0 // pred_region
    _
  $region21: #{_lambda_.13} parent=0 // pred_fallthru
    _
  // Predicated region
  $region22: #{_lambda_.13} parent=0 // pred_check
    _
  $region23: #{_lambda_.13} parent=0 // pred_check_branch
    %202 = sbr.rel (0) target = $region25
  $region24: #{_lambda_.13} parent=0 // pred_region
    _
  $region25: #{_lambda_.13} parent=0 // pred_fallthru
    _

// kernel: _lambda_.16
$region0: #{_lambda_.16}
  #allocation0 [shape = 'u32[]', space=smem, size = 0x4, offset = 0x4, fixed_abs, tag = 'smem constant byte address 0x4 - core index']
  #allocation1 [shape = 'u32[144,128]{1,0:T(1,128)}', space=vmem, size = 0x12000, scoped, tag = 'internal scratch']
  %s0 = inlined_call_operand.vmem [shape: f32[32,128], index: 0, kind: input, shape index: {}]
  %s1 = inlined_call_operand.vmem [shape: f32[1,128], index: 1, kind: input, shape index: {}]
  %s2 = inlined_call_operand.vmem [shape: f32[1,128], index: 2, kind: input, shape index: {}]
  %s3 = inlined_call_operand.vmem [shape: f32[32,128], index: 3, kind: input, shape index: {}]
  %s4 = inlined_call_operand.vmem [shape: f32[32,128], index: 4, kind: output, shape index: {}]
  %s5 = sld [smem:[#allocation0]]
  $region26: #{_lambda_.16} parent=0
    _
  %s7 = ssub.s32 1, %s5
  %s8 = scalar_select 0, %s7, %s5
  // Predicated region
  $region2: #{_lambda_.16} parent=0 // pred_check
    _
  $region3: #{_lambda_.16} parent=0 // pred_check_branch
    %10 = sbr.rel (0) target = $region5
  $region4: #{_lambda_.16} parent=0 // pred_region
    _
  $region5: #{_lambda_.16} parent=0 // pred_fallthru
    _
  // Predicated region
  $region6: #{_lambda_.16} parent=0 // pred_check
    _
  $region7: #{_lambda_.16} parent=0 // pred_check_branch
    %12 = sbr.rel (0) target = $region9
  $region8: #{_lambda_.16} parent=0 // pred_region
    _
  $region9: #{_lambda_.16} parent=0 // pred_fallthru
    _
  // Predicated region
  $region10: #{_lambda_.16} parent=0 // pred_check
    _
  $region11: #{_lambda_.16} parent=0 // pred_check_branch
    %14 = sbr.rel (0) target = $region13
  $region12: #{_lambda_.16} parent=0 // pred_region
    _
  $region13: #{_lambda_.16} parent=0 // pred_fallthru
    _
  // Predicated region
  $region14: #{_lambda_.16} parent=0 // pred_check
    _
  $region15: #{_lambda_.16} parent=0 // pred_check_branch
    %16 = sbr.rel (0) target = $region17
  $region16: #{_lambda_.16} parent=0 // pred_region
    _
  $region17: #{_lambda_.16} parent=0 // pred_fallthru
    _
  %v17 = vld [vmem:[%s0] sm:$0xff]
  %v18 = vld [vmem:[%s0 + $0x8] sm:$0xff]
  %v19 = vld [vmem:[%s0 + $0x10] sm:$0xff]
  %v20 = vld [vmem:[%s0 + $0x18] sm:$0xff]
  %v21 = vld [vmem:[%s1] sm:$0x1]
  %v23 = vlaneseq
  %v24 = vshrl.u32 %v23, 7
  %v25 = vsub.s32 0, %v24
  %v26 = vrot.slane %v21, %v25
  %v28 = vmul.f32 %v17, %v26
  %v29 = vmul.f32 %v18, %v26
  %v30 = vmul.f32 %v19, %v26
  %v31 = vmul.f32 %v20, %v26
  %v32 = vld [vmem:[%s2] sm:$0x1]
  %v34 = vlaneseq
  %v35 = vshrl.u32 %v34, 7
  %v36 = vsub.s32 0, %v35
  %v37 = vrot.slane %v32, %v36
  %v39 = vadd.f32 %v28, %v37
  %v40 = vadd.f32 %v29, %v37
  %v41 = vadd.f32 %v30, %v37
  %v42 = vadd.f32 %v31, %v37
  %v43 = vld [vmem:[%s3] sm:$0xff]
  %v44 = vld [vmem:[%s3 + $0x8] sm:$0xff]
  %v45 = vld [vmem:[%s3 + $0x10] sm:$0xff]
  %v46 = vld [vmem:[%s3 + $0x18] sm:$0xff]
  %v47 = vadd.f32 %v39, %v43
  %v48 = vadd.f32 %v40, %v44
  %v49 = vadd.f32 %v41, %v45
  %v50 = vadd.f32 %v42, %v46
  %v51 = vmax.f32 %v47, 0.0
  %v52 = vmax.f32 %v48, 0.0
  %v53 = vmax.f32 %v49, 0.0
  %v54 = vmax.f32 %v50, 0.0
  %55 = vst [vmem:[%s4] sm:$0xff] %v51
  %56 = vst [vmem:[%s4 + $0x8] sm:$0xff] %v52
  %57 = vst [vmem:[%s4 + $0x10] sm:$0xff] %v53
  %58 = vst [vmem:[%s4 + $0x18] sm:$0xff] %v54
  // Predicated region
  $region18: #{_lambda_.16} parent=0 // pred_check
    _
  $region19: #{_lambda_.16} parent=0 // pred_check_branch
    %60 = sbr.rel (0) target = $region21
  $region20: #{_lambda_.16} parent=0 // pred_region
    _
  $region21: #{_lambda_.16} parent=0 // pred_fallthru
    _
  // Predicated region
  $region22: #{_lambda_.16} parent=0 // pred_check
    _
  $region23: #{_lambda_.16} parent=0 // pred_check_branch
    %62 = sbr.rel (0) target = $region25
  $region24: #{_lambda_.16} parent=0 // pred_region
    _
  $region25: #{_lambda_.16} parent=0 // pred_fallthru
    _

// kernel: _lambda_.17
$region0: #{_lambda_.17}
  #allocation0 [shape = 'u32[]', space=smem, size = 0x4, offset = 0x4, fixed_abs, tag = 'smem constant byte address 0x4 - core index']
  #allocation1 [shape = 'u32[144,128]{1,0:T(1,128)}', space=vmem, size = 0x12000, scoped, tag = 'internal scratch']
  %s0 = inlined_call_operand.vmem [shape: bf16[32,144], index: 0, kind: input, shape index: {}]
  %s1 = inlined_call_operand.vmem [shape: bf16[144,128], index: 1, kind: input, shape index: {}]
  %s2 = inlined_call_operand.vmem [shape: f32[1,128], index: 2, kind: input, shape index: {}]
  %s3 = inlined_call_operand.hbm [shape: f32[32,128], index: 3, kind: output, shape index: {}]
  %s4 = sld [smem:[#allocation0]]
  $region22: #{_lambda_.17} parent=0
    _
  %s6 = ssub.s32 1, %s4
  %s7 = scalar_select 0, %s6, %s4
  $region1: #{_lambda_.17} parent=0
    #allocation2 [shape = 'u8[16384]{0}', space=vmem, size = 0x4000, scoped, tag = 'output window, operand 0, single buffered']
    #allocation3 [shape = 's32[1]{0}', space=sflag, size = 0x4, scoped, tag = 'scoped memory for _lambda_.17']
    %8 = vsyncpa [#allocation3], 0
    // Predicated region
    $region2: #{_lambda_.17} parent=1 // pred_check
      _
    $region3: #{_lambda_.17} parent=1 // pred_check_branch
      %10 = sbr.rel (0) target = $region5
    $region4: #{_lambda_.17} parent=1 // pred_region
      _
    $region5: #{_lambda_.17} parent=1 // pred_fallthru
      _
    // Predicated region
    $region6: #{_lambda_.17} parent=1 // pred_check
      _
    $region7: #{_lambda_.17} parent=1 // pred_check_branch
      %12 = sbr.rel (0) target = $region9
    $region8: #{_lambda_.17} parent=1 // pred_region
      _
    $region9: #{_lambda_.17} parent=1 // pred_fallthru
      _
    // Predicated region
    $region10: #{_lambda_.17} parent=1 // pred_check
      _
    $region11: #{_lambda_.17} parent=1 // pred_check_branch
      %14 = sbr.rel (0) target = $region13
    $region12: #{_lambda_.17} parent=1 // pred_region
      _
    $region13: #{_lambda_.17} parent=1 // pred_fallthru
      _
    %v16 = vld [vmem:[%s0] sm:$0xff]
    %v17 = vld [vmem:[%s0 + $0x8] sm:$0xff]
    %v18 = vld [vmem:[%s0 + $0x10] sm:$0xff]
    %v19 = vld [vmem:[%s0 + $0x18] sm:$0xff]
    %v20 = vld [vmem:[%s1] sm:$0xf]
    %v21 = vld [vmem:[%s1 + $0x4] sm:$0xf]
    %v22 = vld [vmem:[%s1 + $0x8] sm:$0xf]
    %v23 = vld [vmem:[%s1 + $0xc] sm:$0xf]
    %v24 = vld [vmem:[%s1 + $0x10] sm:$0xf]
    %v25 = vld [vmem:[%s1 + $0x14] sm:$0xf]
    %v26 = vld [vmem:[%s1 + $0x18] sm:$0xf]
    %v27 = vld [vmem:[%s1 + $0x1c] sm:$0xf]
    %v28 = vld [vmem:[%s1 + $0x20] sm:$0xf]
    %v29 = vld [vmem:[%s1 + $0x24] sm:$0xf]
    %v30 = vld [vmem:[%s1 + $0x28] sm:$0xf]
    %v31 = vld [vmem:[%s1 + $0x2c] sm:$0xf]
    %v32 = vld [vmem:[%s1 + $0x30] sm:$0xf]
    %v33 = vld [vmem:[%s1 + $0x34] sm:$0xf]
    %v34 = vld [vmem:[%s1 + $0x38] sm:$0xf]
    %v35 = vld [vmem:[%s1 + $0x3c] sm:$0xf]
    %v36 = vld [vmem:[%s1 + $0x40] sm:$0xf]
    %v37 = vld [vmem:[%s1 + $0x44] sm:$0xf]
    %v38 = vld [vmem:[%s2] sm:$0x1]
    %v40 = vlaneseq
    %v41 = vshrl.u32 %v40, 7
    %v42 = vsub.s32 0, %v41
    %v43 = vrot.slane %v38, %v42
    %v49 = vunpack.c.l.b16 %v16
    %v50 = vunpack.c.h.b16 %v16
    %v51 = vunpack.c.l.b16 %v17
    %v52 = vunpack.c.h.b16 %v17
    %v53 = vunpack.c.l.b16 %v18
    %v54 = vunpack.c.h.b16 %v18
    %v55 = vunpack.c.l.b16 %v19
    %v56 = vunpack.c.h.b16 %v19
    %v57 = vpack.c.b16 %v51, %v49
    %v58 = vpack.c.b16 %v52, %v50
    %v59 = vpack.c.b16 %v55, %v53
    %v60 = vpack.c.b16 %v56, %v54
    %v81 = vunpack.c.l.b16 %v20
    %v82 = vunpack.c.l.b16 %v21
    %v83 = vunpack.c.l.b16 %v22
    %v84 = vunpack.c.l.b16 %v23
    %v85 = vunpack.c.l.b16 %v24
    %v86 = vunpack.c.l.b16 %v25
    %v87 = vunpack.c.l.b16 %v26
    %v88 = vunpack.c.l.b16 %v27
    %v89 = vunpack.c.l.b16 %v28
    %v90 = vunpack.c.l.b16 %v29
    %v91 = vunpack.c.l.b16 %v30
    %v92 = vunpack.c.l.b16 %v31
    %v93 = vunpack.c.l.b16 %v32
    %v94 = vunpack.c.l.b16 %v33
    %v95 = vunpack.c.l.b16 %v34
    %v96 = vunpack.c.l.b16 %v35
    %v97 = vunpack.c.l.b16 %v36
    %v98 = vunpack.c.l.b16 %v37
    %v99 = vpack.c.b16 %v82, %v81
    %v100 = vpack.c.b16 %v84, %v83
    %v101 = vpack.c.b16 %v86, %v85
    %v102 = vpack.c.b16 %v88, %v87
    %v103 = vpack.c.b16 %v90, %v89
    %v104 = vpack.c.b16 %v92, %v91
    %v105 = vpack.c.b16 %v94, %v93
    %v106 = vpack.c.b16 %v96, %v95
    %v107 = vpack.c.b16 %v98, %v97
    %vm117 = vcmask 130048
    %v119 = vsel %vm117, %v58, 0
    %v122 = vsel %vm117, %v60, 0
    %124 = vmatprep.subr.bf16.mxu0 0
    %125 = vmatpush1.bf16.msra.mxu0 %v99
    %126 = vmatprep.subr.bf16.mxu0 0
    %127 = vmatpush1.bf16.msra.mxu0 %v100
    %128 = vmatprep.subr.bf16.mxu0 0
    %129 = vmatpush1.bf16.msra.mxu0 %v101
    %130 = vmatprep.subr.bf16.mxu0 0
    %131 = vmatpush1.bf16.msra.mxu0 %v102
    %132 = vmatprep.subr.bf16.mxu0 0
    %133 = vmatpush1.bf16.msra.mxu0 %v103
    %134 = vmatprep.subr.bf16.mxu0 0
    %135 = vmatpush1.bf16.msra.mxu0 %v104
    %136 = vmatprep.subr.bf16.mxu0 0
    %137 = vmatpush1.bf16.msra.mxu0 %v105
    %138 = vmatprep.subr.bf16.mxu0 0
    %139 = vmatpush1.bf16.msra.mxu0 %v106
    %140 = vmatprep.subr.bf16.mxu0 0
    %141 = vmatpush1.bf16.msra.mxu0 %v107
    %142 = vmatprep.subr.bf16.mxu0 0
    %143 = vmatpush1.bf16.msra.mxu0 0
    %144 = vmatprep.subr.bf16.mxu0 0
    %145 = vmatpush1.bf16.msra.mxu0 0
    %146 = vmatprep.subr.bf16.mxu0 0
    %147 = vmatpush1.bf16.msra.mxu0 0
    %148 = vmatprep.subr.bf16.mxu0 0
    %149 = vmatpush1.bf16.msra.mxu0 0
    %150 = vmatprep.subr.bf16.mxu0 0
    %151 = vmatpush1.bf16.msra.mxu0 0
    %152 = vmatprep.subr.bf16.mxu0 0
    %153 = vmatpush1.bf16.msra.mxu0 0
    %154 = vmatprep.subr.bf16.mxu0 0
    %155 = vmatpush1.bf16.msra.mxu0 0
    %156 = vmatprep.mubr.bf16.mxu0 %v119
    %157 = vmatmul.mubr.bf16.gmra.mrb[0].mxu0 %v57
    %v158 = vpop.f32.mrb[0].mxu0
    %v159 = vadd.f32 %v43, %v158
    %v160 = vpop.f32.mrb[0].mxu0
    %v161 = vpop.f32.mrb[0].mxu0
    %v162 = vadd.f32 %v43, %v161
    %v163 = vpop.f32.mrb[0].mxu0
    %164 = vmatprep.mubr.bf16.mxu0 %v122
    %165 = vmatmul.mubr.bf16.gmra.mrb[0].mxu0 %v59
    %v166 = vpop.f32.mrb[0].mxu0
    %v167 = vadd.f32 %v43, %v166
    %v168 = vpop.f32.mrb[0].mxu0
    %v169 = vpop.f32.mrb[0].mxu0
    %v170 = vadd.f32 %v43, %v169
    %v171 = vpop.f32.mrb[0].mxu0
    %172 = vdwg.mxu0
    %173 = vst [vmem:[#allocation2] sm:$0xff] %v159
    %174 = vst [vmem:[#allocation2 + $0x8] sm:$0xff] %v162
    %175 = vst [vmem:[#allocation2 + $0x10] sm:$0xff] %v167
    %176 = vst [vmem:[#allocation2 + $0x18] sm:$0xff] %v170
    // Predicated region
    $region14: #{_lambda_.17} parent=1 // pred_check
      _
    $region15: #{_lambda_.17} parent=1 // pred_check_branch
      %178 = sbr.rel (0) target = $region17
    $region16: #{_lambda_.17} parent=1 // pred_region
      %s180 = ssub.s32 512, 512
      %181 = vsyncadd [#allocation3], %s180
      %s182 = sshll.u32 [#allocation2], 4
      %s183 = int_to_ptr.vmem [resolvable:$true] %s182
      %188 = dma.vmem_to_hbm [thread:$0]  %s183, 512, %s3, [#allocation3], 128, 128, 8
    $region17: #{_lambda_.17} parent=1 // pred_fallthru
      _
    // Predicated region
    $region18: #{_lambda_.17} parent=1 // pred_check
      _
    $region19: #{_lambda_.17} parent=1 // pred_check_branch
      %190 = sbr.rel (0) target = $region21
    $region20: #{_lambda_.17} parent=1 // pred_region
      %191 = dma.done [#allocation3], 512
    $region21: #{_lambda_.17} parent=1 // pred_fallthru
      _
    %192 = vsyncpa [#allocation3], 1

</llo_original>
